<compile_context>
chip_gen: v7x
topology: tpu7x:2x2x1
jax: 0.10.0
libtpu: 0.0.40
codegen_flags: <defaults>
</compile_context>

<pallas_src>
import numpy as np
import jax
import jax.numpy as jnp
from jax.experimental import pallas as pl
from jax.experimental.pallas import tpu as pltpu


# --------------------------------------------------------------- kernel -----
def _autoencoder_kernel(x_ref,
                        w1_ref, b1_ref, w2_ref, b2_ref,
                        w3_ref, b3_ref, w4_ref, b4_ref,
                        dec_ref, enc_ref):
    """Fused encoder + decoder forward on one batch tile (f32 accumulation)."""
    x = x_ref[...]

    # ---- encoder: Linear(D,16) + ReLU, Linear(16,8) + ReLU ----
    h1 = jnp.dot(x, w1_ref[...], preferred_element_type=jnp.float32)
    h1 = jnp.maximum(h1 + b1_ref[...].astype(jnp.float32), 0.0)

    enc = jnp.dot(h1.astype(w2_ref.dtype), w2_ref[...],
                  preferred_element_type=jnp.float32)
    enc = jnp.maximum(enc + b2_ref[...].astype(jnp.float32), 0.0)

    # ---- decoder: Linear(8,16) + ReLU, Linear(16,D) + Sigmoid ----
    h3 = jnp.dot(enc.astype(w3_ref.dtype), w3_ref[...],
                 preferred_element_type=jnp.float32)
    h3 = jnp.maximum(h3 + b3_ref[...].astype(jnp.float32), 0.0)

    logits = jnp.dot(h3.astype(w4_ref.dtype), w4_ref[...],
                     preferred_element_type=jnp.float32)
    dec = jax.nn.sigmoid(logits + b4_ref[...].astype(jnp.float32))   # exp/rcp on EUP

    dec_ref[...] = dec.astype(dec_ref.dtype)
    enc_ref[...] = enc.astype(enc_ref.dtype)       # latent kept in f32


# -------------------------------------------------------------- sizing ------
def _round_up(v, m):
    return -(-v // m) * m


def _sublane_multiple(dtype):
    # 8 rows per sublane tile for 4-byte dtypes, 16 for bf16, 32 for int8/fp8.
    return 8 * max(1, 4 // jnp.dtype(dtype).itemsize)


def _padded_vmem_bytes(shape, dtype):
    """VMEM footprint of a (rows, cols) array after (sublane, 128-lane) padding."""
    itemsize = jnp.dtype(dtype).itemsize
    rows = int(np.prod(shape[:-1])) if len(shape) > 1 else 1
    return (_round_up(max(rows, 1), _sublane_multiple(dtype))
            * _round_up(shape[-1], 128) * itemsize)


def _vmem_capacity_bytes():
    """Physical VMEM on this chip; conservative (v7x = 64 MiB) fallback."""
    try:
        cap = getattr(pltpu.get_tpu_info(), "vmem_capacity_bytes", None)
        if cap:
            return int(cap)
    except Exception:
        pass
    return 64 << 20


def _pick_batch_tile(B, D, io_dtype, enc_dtype, resident_bytes, vmem_cap,
                     min_steps=8):
    """Largest batch tile that
       (a) fits this generation's VMEM: 2 pipeline buffers of the lane-padded
           x / decoded / encoded tiles + resident (possibly double-buffered)
           weights + 16 MiB headroom, and
       (b) keeps the grid >= min_steps long when B permits (v7x: 2 TCs x 4
           steps each; for large B this also implies >= ~1 MiB HBM traffic
           per step, amortizing the ~0.35 us/step fixed overhead).
       Tiles are multiples of the dtype's sublane packing (16 rows for bf16),
       and multiples of 128 once they are large enough."""
    io_i = jnp.dtype(io_dtype).itemsize
    enc_i = jnp.dtype(enc_dtype).itemsize
    sub = _sublane_multiple(io_dtype)

    # (a) VMEM bound — note encoded (B,8) pads to 128 lanes in VMEM.
    d_pad = _round_up(max(D, 1), 128)
    row_vmem = 2 * d_pad * io_i + 128 * enc_i            # bytes/row per buffer
    budget = max(vmem_cap - (16 << 20) - 2 * resident_bytes, 2 << 20)
    rows_vmem = max((budget // (2 * row_vmem)) // sub * sub, sub)

    # (b) grid-length bound.
    rows_steps = max((B // min_steps) // sub * sub, sub)

    tile = min(rows_vmem, rows_steps, _round_up(B, sub))
    tile = max((tile // sub) * sub, sub)
    if tile >= 128:
        tile = (tile // 128) * 128                       # lane/DMA friendly
    return tile


def _vmem_limit_bytes(batch_tile, D, io_dtype, enc_dtype, resident_bytes,
                      vmem_cap):
    """Accurate scoped-VMEM budget: double-buffered lane-padded tiles +
    resident weights (counted double in case single-buffering is rejected) +
    a small slack for Mosaic scratch.  Capped under physical VMEM."""
    io_i = jnp.dtype(io_dtype).itemsize
    enc_i = jnp.dtype(enc_dtype).itemsize
    d_pad = _round_up(max(D, 1), 128)
    tile_bytes = batch_tile * (2 * d_pad * io_i + 128 * enc_i)
    est = 2 * tile_bytes + 2 * resident_bytes + (4 << 20)
    return int(min(max(est, 32 << 20), vmem_cap - (4 << 20)))


# ------------------------------------------------------------- wrapper ------
def autoencoder_forward(x, params, *, io_dtype=jnp.bfloat16, batch_tile=None,
                        min_steps=8):
    """Fused autoencoder forward.

    x:      (B, D) float array.
    params: dict with w1 (D,16), b1 (1,16), w2 (16,8), b2 (1,8),
                      w3 (8,16), b3 (1,16), w4 (16,D), b4 (1,D)
            (weights pre-transposed to (in, out)).
    Returns (decoded (B, D) in io_dtype, encoded (B, 8) in float32).
    """
    B, D = x.shape
    io_dtype = jnp.dtype(io_dtype)
    enc_dtype = jnp.dtype(jnp.float32)

    # Cast HBM-resident operands to the bandwidth-cheap I/O dtype.
    x_io = x.astype(io_dtype)
    p = {k: v.astype(io_dtype) for k, v in params.items()}
    w1, b1, w2, b2 = p["w1"], p["b1"], p["w2"], p["b2"]
    w3, b3, w4, b4 = p["w3"], p["b3"], p["w4"], p["b4"]
    weights = (w1, b1, w2, b2, w3, b3, w4, b4)
    H2 = w2.shape[1]                                     # latent width (8)

    vmem_cap = _vmem_capacity_bytes()
    resident_bytes = sum(_padded_vmem_bytes(a.shape, io_dtype) for a in weights)

    if batch_tile is None:
        batch_tile = _pick_batch_tile(B, D, io_dtype, enc_dtype,
                                      resident_bytes, vmem_cap,
                                      min_steps=min_steps)
    sub = _sublane_multiple(io_dtype)
    assert batch_tile % sub == 0, (
        f"batch_tile must be a multiple of {sub} for {io_dtype} I/O")

    # Pad the batch so the grid divides evenly; padded rows are sliced off.
    steps = -(-B // batch_tile)
    B_pad = steps * batch_tile
    if B_pad != B:
        x_io = jnp.pad(x_io, ((0, B_pad - B), (0, 0)))

    # Advisory cost hint so XLA can overlap this few-us kernel with neighbours.
    io_i = io_dtype.itemsize
    weight_hbm_bytes = sum(int(a.size) * io_i for a in weights)
    cost = pl.CostEstimate(
        flops=int(2 * B_pad * (D * 16 + 16 * 8 + 8 * 16 + 16 * D)),
        transcendentals=int(B_pad * D),                  # sigmoid exp
        bytes_accessed=int(B_pad * (2 * D * io_i + H2 * enc_dtype.itemsize)
                           + weight_hbm_bytes),
    )
    vmem_limit = _vmem_limit_bytes(batch_tile, D, io_dtype, enc_dtype,
                                   resident_bytes, vmem_cap)

    def build(single_buffer_weights):
        if single_buffer_weights:
            # Grid-constant operands: fetched once, single-buffered.
            full = lambda a: pl.BlockSpec(a.shape, lambda i: (0, 0),
                                          pipeline_mode=pl.Buffered(1))
        else:
            full = lambda a: pl.BlockSpec(a.shape, lambda i: (0, 0))
        grid_spec = pltpu.PrefetchScalarGridSpec(
            num_scalar_prefetch=0,
            grid=(steps,),
            in_specs=[
                pl.BlockSpec((batch_tile, D), lambda i: (i, 0)),   # x tile
                full(w1), full(b1), full(w2), full(b2),
                full(w3), full(b3), full(w4), full(b4),
            ],
            out_specs=[
                pl.BlockSpec((batch_tile, D), lambda i: (i, 0)),    # decoded
                pl.BlockSpec((batch_tile, H2), lambda i: (i, 0)),   # encoded
            ],
        )
        return pl.pallas_call(
            _autoencoder_kernel,
            out_shape=(
                jax.ShapeDtypeStruct((B_pad, D), io_dtype),
                jax.ShapeDtypeStruct((B_pad, H2), enc_dtype),
            ),
            grid_spec=grid_spec,
            compiler_params=pltpu.CompilerParams(
                dimension_semantics=("parallel",),
                vmem_limit_bytes=vmem_limit,
            ),
            cost_estimate=cost,
        )

    args = (x_io, *weights)
    try:
        decoded, encoded = build(True)(*args)
    except Exception:
        # pipeline_mode=pl.Buffered(1) not supported on this build: fall back
        # to default (double-buffered) specs for the resident weights.
        decoded, encoded = build(False)(*args)

    if B_pad != B:
        decoded = decoded[:B]
        encoded = encoded[:B]
    return decoded, encoded


# ---------------------------------------------------------- params / ref ----
def init_params(key, input_dim):
    """torch.nn.Linear-like uniform init; weights stored as (in, out)."""
    dims = [(input_dim, 16), (16, 8), (8, 16), (16, input_dim)]
    params = {}
    for idx, (fan_in, fan_out) in enumerate(dims, start=1):
        key, kw, kb = jax.random.split(key, 3)
        bound = 1.0 / np.sqrt(fan_in)
        params[f"w{idx}"] = jax.random.uniform(
            kw, (fan_in, fan_out), jnp.float32, -bound, bound)
        params[f"b{idx}"] = jax.random.uniform(
            kb, (1, fan_out), jnp.float32, -bound, bound)
    return params


def reference_forward(x, p):
    """Pure-JAX reference of the PyTorch forward pass (f32)."""
    h1 = jnp.maximum(x @ p["w1"] + p["b1"], 0.0)
    enc = jnp.maximum(h1 @ p["w2"] + p["b2"], 0.0)
    h3 = jnp.maximum(enc @ p["w3"] + p["b3"], 0.0)
    dec = jax.nn.sigmoid(h3 @ p["w4"] + p["b4"])
    return dec, enc


# ----------------------------------------------------------------- demo -----
if __name__ == "__main__":
    key = jax.random.PRNGKey(0)
    k_x, k_p = jax.random.split(key)

    # Small tabular-style demo shapes (input_dim = number of features).
    B, input_dim = 256, 64
    x = jax.random.uniform(k_x, (B, input_dim), jnp.float32)   # sigmoid range
    params = init_params(k_p, input_dim)

    dec_ref, enc_ref = reference_forward(x, params)

    # ---- default path: bf16 I/O, f32 accumulation, f32 encoded latent ----
    dec16, enc16 = autoencoder_forward(x, params)
    jax.block_until_ready((dec16, enc16))
    assert dec16.shape == (B, input_dim) and enc16.shape == (B, 8)
    assert dec16.dtype == jnp.bfloat16 and enc16.dtype == jnp.float32
    np.testing.assert_allclose(np.asarray(dec16.astype(jnp.float32)),
                               np.asarray(dec_ref), rtol=5e-2, atol=5e-2)
    np.testing.assert_allclose(np.asarray(enc16),
                               np.asarray(enc_ref), rtol=5e-2, atol=5e-2)

    # ---- f32 I/O path: matches the reference tightly ----
    dec32, enc32 = autoencoder_forward(x, params, io_dtype=jnp.float32)
    jax.block_until_ready((dec32, enc32))
    np.testing.assert_allclose(np.asarray(dec32), np.asarray(dec_ref),
                               rtol=1e-4, atol=1e-4)
    np.testing.assert_allclose(np.asarray(enc32), np.asarray(enc_ref),
                               rtol=1e-4, atol=1e-4)

    print("KERNEL_OK")
</pallas_src>

<mosaic_0001>
module attributes {stable_mosaic.version = 11 : i64} {
  func.func @_autoencoder_kernel(%arg0: i32, %arg1: memref<32x64xbf16, #tpu.memory_space<vmem>>, %arg2: memref<64x16xbf16, #tpu.memory_space<vmem>>, %arg3: memref<1x16xbf16, #tpu.memory_space<vmem>>, %arg4: memref<16x8xbf16, #tpu.memory_space<vmem>>, %arg5: memref<1x8xbf16, #tpu.memory_space<vmem>>, %arg6: memref<8x16xbf16, #tpu.memory_space<vmem>>, %arg7: memref<1x16xbf16, #tpu.memory_space<vmem>>, %arg8: memref<16x64xbf16, #tpu.memory_space<vmem>>, %arg9: memref<1x64xbf16, #tpu.memory_space<vmem>>, %arg10: memref<32x64xbf16, #tpu.memory_space<vmem>>, %arg11: memref<32x8xf32, #tpu.memory_space<vmem>>) attributes {dimension_semantics = [#tpu.dimension_semantics<parallel>], iteration_bounds = array<i64: 8>, scalar_prefetch = 0 : i64, scratch_operands = 0 : i64, tpu.core_type = #tpu.core_type<tc>, window_params = [{transform_indices = @transform_0, window_bounds = array<i64: 32, 64>}, {pipeline_mode = #tpu.pipeline_mode<synchronous>, transform_indices = @transform_1, window_bounds = array<i64: 64, 16>}, {pipeline_mode = #tpu.pipeline_mode<synchronous>, transform_indices = @transform_2, window_bounds = array<i64: 1, 16>}, {pipeline_mode = #tpu.pipeline_mode<synchronous>, transform_indices = @transform_3, window_bounds = array<i64: 16, 8>}, {pipeline_mode = #tpu.pipeline_mode<synchronous>, transform_indices = @transform_4, window_bounds = array<i64: 1, 8>}, {pipeline_mode = #tpu.pipeline_mode<synchronous>, transform_indices = @transform_5, window_bounds = array<i64: 8, 16>}, {pipeline_mode = #tpu.pipeline_mode<synchronous>, transform_indices = @transform_6, window_bounds = array<i64: 1, 16>}, {pipeline_mode = #tpu.pipeline_mode<synchronous>, transform_indices = @transform_7, window_bounds = array<i64: 16, 64>}, {pipeline_mode = #tpu.pipeline_mode<synchronous>, transform_indices = @transform_8, window_bounds = array<i64: 1, 64>}, {transform_indices = @transform_9, window_bounds = array<i64: 32, 64>}, {transform_indices = @transform_10, window_bounds = array<i64: 32, 8>}]} {
    %c0 = arith.constant 0 : index
    %c0_0 = arith.constant 0 : index
    %0 = vector.load %arg1[%c0, %c0_0] : memref<32x64xbf16, #tpu.memory_space<vmem>>, vector<32x64xbf16>
    %c0_1 = arith.constant 0 : index
    %c0_2 = arith.constant 0 : index
    %1 = vector.load %arg2[%c0_1, %c0_2] : memref<64x16xbf16, #tpu.memory_space<vmem>>, vector<64x16xbf16>
    %cst = arith.constant dense<0.000000e+00> : vector<32x16xf32>
    %2 = tpu.matmul %0, %1, %cst {dimension_numbers = #tpu.dot_dimension_numbers<[1], [0], [0], [1], [0, 0, 1, 1], [], []>} : vector<32x64xbf16>, vector<64x16xbf16>, vector<32x16xf32> -> vector<32x16xf32>
    %c0_3 = arith.constant 0 : index
    %c0_4 = arith.constant 0 : index
    %3 = vector.load %arg3[%c0_3, %c0_4] : memref<1x16xbf16, #tpu.memory_space<vmem>>, vector<1x16xbf16>
    %4 = arith.extf %3 : vector<1x16xbf16> to vector<1x16xf32>
    %5 = vector.broadcast %4 : vector<1x16xf32> to vector<32x16xf32>
    %6 = arith.addf %2, %5 : vector<32x16xf32>
    %cst_5 = arith.constant 0.000000e+00 : f32
    %7 = vector.broadcast %cst_5 : f32 to vector<32x16xf32>
    %8 = arith.maximumf %6, %7 : vector<32x16xf32>
    %9 = arith.truncf %8 : vector<32x16xf32> to vector<32x16xbf16>
    %c0_6 = arith.constant 0 : index
    %c0_7 = arith.constant 0 : index
    %10 = vector.load %arg4[%c0_6, %c0_7] : memref<16x8xbf16, #tpu.memory_space<vmem>>, vector<16x8xbf16>
    %cst_8 = arith.constant dense<0.000000e+00> : vector<32x8xf32>
    %11 = tpu.matmul %9, %10, %cst_8 {dimension_numbers = #tpu.dot_dimension_numbers<[1], [0], [0], [1], [0, 0, 1, 1], [], []>} : vector<32x16xbf16>, vector<16x8xbf16>, vector<32x8xf32> -> vector<32x8xf32>
    %c0_9 = arith.constant 0 : index
    %c0_10 = arith.constant 0 : index
    %12 = vector.load %arg5[%c0_9, %c0_10] : memref<1x8xbf16, #tpu.memory_space<vmem>>, vector<1x8xbf16>
    %13 = arith.extf %12 : vector<1x8xbf16> to vector<1x8xf32>
    %14 = vector.broadcast %13 : vector<1x8xf32> to vector<32x8xf32>
    %15 = arith.addf %11, %14 : vector<32x8xf32>
    %cst_11 = arith.constant 0.000000e+00 : f32
    %16 = vector.broadcast %cst_11 : f32 to vector<32x8xf32>
    %17 = arith.maximumf %15, %16 : vector<32x8xf32>
    %18 = arith.truncf %17 : vector<32x8xf32> to vector<32x8xbf16>
    %c0_12 = arith.constant 0 : index
    %c0_13 = arith.constant 0 : index
    %19 = vector.load %arg6[%c0_12, %c0_13] : memref<8x16xbf16, #tpu.memory_space<vmem>>, vector<8x16xbf16>
    %cst_14 = arith.constant dense<0.000000e+00> : vector<32x16xf32>
    %20 = tpu.matmul %18, %19, %cst_14 {dimension_numbers = #tpu.dot_dimension_numbers<[1], [0], [0], [1], [0, 0, 1, 1], [], []>} : vector<32x8xbf16>, vector<8x16xbf16>, vector<32x16xf32> -> vector<32x16xf32>
    %c0_15 = arith.constant 0 : index
    %c0_16 = arith.constant 0 : index
    %21 = vector.load %arg7[%c0_15, %c0_16] : memref<1x16xbf16, #tpu.memory_space<vmem>>, vector<1x16xbf16>
    %22 = arith.extf %21 : vector<1x16xbf16> to vector<1x16xf32>
    %23 = vector.broadcast %22 : vector<1x16xf32> to vector<32x16xf32>
    %24 = arith.addf %20, %23 : vector<32x16xf32>
    %cst_17 = arith.constant 0.000000e+00 : f32
    %25 = vector.broadcast %cst_17 : f32 to vector<32x16xf32>
    %26 = arith.maximumf %24, %25 : vector<32x16xf32>
    %27 = arith.truncf %26 : vector<32x16xf32> to vector<32x16xbf16>
    %c0_18 = arith.constant 0 : index
    %c0_19 = arith.constant 0 : index
    %28 = vector.load %arg8[%c0_18, %c0_19] : memref<16x64xbf16, #tpu.memory_space<vmem>>, vector<16x64xbf16>
    %cst_20 = arith.constant dense<0.000000e+00> : vector<32x64xf32>
    %29 = tpu.matmul %27, %28, %cst_20 {dimension_numbers = #tpu.dot_dimension_numbers<[1], [0], [0], [1], [0, 0, 1, 1], [], []>} : vector<32x16xbf16>, vector<16x64xbf16>, vector<32x64xf32> -> vector<32x64xf32>
    %c0_21 = arith.constant 0 : index
    %c0_22 = arith.constant 0 : index
    %30 = vector.load %arg9[%c0_21, %c0_22] : memref<1x64xbf16, #tpu.memory_space<vmem>>, vector<1x64xbf16>
    %31 = arith.extf %30 : vector<1x64xbf16> to vector<1x64xf32>
    %32 = vector.broadcast %31 : vector<1x64xf32> to vector<32x64xf32>
    %33 = arith.addf %29, %32 : vector<32x64xf32>
    %34 = arith.negf %33 : vector<32x64xf32>
    %35 = math.exp %34 : vector<32x64xf32>
    %cst_23 = arith.constant 1.000000e+00 : f32
    %36 = vector.broadcast %cst_23 : f32 to vector<32x64xf32>
    %37 = arith.addf %36, %35 : vector<32x64xf32>
    %38 = arith.divf %36, %37 : vector<32x64xf32>
    %39 = arith.truncf %38 : vector<32x64xf32> to vector<32x64xbf16>
    %c0_24 = arith.constant 0 : index
    %c0_25 = arith.constant 0 : index
    %40 = vector.load %arg10[%c0_24, %c0_25] : memref<32x64xbf16, #tpu.memory_space<vmem>>, vector<32x64xbf16>
    tpu.vector_store %arg10[%c0_24, %c0_25], %39 {strides = array<i32>} : memref<32x64xbf16, #tpu.memory_space<vmem>>, vector<32x64xbf16>,
    %c0_26 = arith.constant 0 : index
    %c0_27 = arith.constant 0 : index
    %41 = vector.load %arg11[%c0_26, %c0_27] : memref<32x8xf32, #tpu.memory_space<vmem>>, vector<32x8xf32>
    tpu.vector_store %arg11[%c0_26, %c0_27], %17 {strides = array<i32>} : memref<32x8xf32, #tpu.memory_space<vmem>>, vector<32x8xf32>,
    return
  }
  func.func @transform_0(%arg0: i32) -> (i32, i32) {
    %c0_i32 = arith.constant 0 : i32
    %c0_i32_0 = arith.constant 0 : i32
    return %arg0, %c0_i32 : i32, i32
  }
  func.func @transform_1(%arg0: i32) -> (i32, i32) {
    %c0_i32 = arith.constant 0 : i32
    %c0_i32_0 = arith.constant 0 : i32
    %c0_i32_1 = arith.constant 0 : i32
    return %c0_i32, %c0_i32_0 : i32, i32
  }
  func.func @transform_2(%arg0: i32) -> (i32, i32) {
    %c0_i32 = arith.constant 0 : i32
    %c0_i32_0 = arith.constant 0 : i32
    %c0_i32_1 = arith.constant 0 : i32
    return %c0_i32, %c0_i32_0 : i32, i32
  }
  func.func @transform_3(%arg0: i32) -> (i32, i32) {
    %c0_i32 = arith.constant 0 : i32
    %c0_i32_0 = arith.constant 0 : i32
    %c0_i32_1 = arith.constant 0 : i32
    return %c0_i32, %c0_i32_0 : i32, i32
  }
  func.func @transform_4(%arg0: i32) -> (i32, i32) {
    %c0_i32 = arith.constant 0 : i32
    %c0_i32_0 = arith.constant 0 : i32
    %c0_i32_1 = arith.constant 0 : i32
    return %c0_i32, %c0_i32_0 : i32, i32
  }
  func.func @transform_5(%arg0: i32) -> (i32, i32) {
    %c0_i32 = arith.constant 0 : i32
    %c0_i32_0 = arith.constant 0 : i32
    %c0_i32_1 = arith.constant 0 : i32
    return %c0_i32, %c0_i32_0 : i32, i32
  }
  func.func @transform_6(%arg0: i32) -> (i32, i32) {
    %c0_i32 = arith.constant 0 : i32
    %c0_i32_0 = arith.constant 0 : i32
    %c0_i32_1 = arith.constant 0 : i32
    return %c0_i32, %c0_i32_0 : i32, i32
  }
  func.func @transform_7(%arg0: i32) -> (i32, i32) {
    %c0_i32 = arith.constant 0 : i32
    %c0_i32_0 = arith.constant 0 : i32
    %c0_i32_1 = arith.constant 0 : i32
    return %c0_i32, %c0_i32_0 : i32, i32
  }
  func.func @transform_8(%arg0: i32) -> (i32, i32) {
    %c0_i32 = arith.constant 0 : i32
    %c0_i32_0 = arith.constant 0 : i32
    %c0_i32_1 = arith.constant 0 : i32
    return %c0_i32, %c0_i32_0 : i32, i32
  }
  func.func @transform_9(%arg0: i32) -> (i32, i32) {
    %c0_i32 = arith.constant 0 : i32
    %c0_i32_0 = arith.constant 0 : i32
    return %arg0, %c0_i32 : i32, i32
  }
  func.func @transform_10(%arg0: i32) -> (i32, i32) {
    %c0_i32 = arith.constant 0 : i32
    %c0_i32_0 = arith.constant 0 : i32
    return %arg0, %c0_i32 : i32, i32
  }
}

module attributes {stable_mosaic.version = 11 : i64} {
  func.func @_autoencoder_kernel(%arg0: i32, %arg1: memref<32x64xbf16, #tpu.memory_space<vmem>>, %arg2: memref<64x16xbf16, #tpu.memory_space<vmem>>, %arg3: memref<1x16xbf16, #tpu.memory_space<vmem>>, %arg4: memref<16x8xbf16, #tpu.memory_space<vmem>>, %arg5: memref<1x8xbf16, #tpu.memory_space<vmem>>, %arg6: memref<8x16xbf16, #tpu.memory_space<vmem>>, %arg7: memref<1x16xbf16, #tpu.memory_space<vmem>>, %arg8: memref<16x64xbf16, #tpu.memory_space<vmem>>, %arg9: memref<1x64xbf16, #tpu.memory_space<vmem>>, %arg10: memref<32x64xbf16, #tpu.memory_space<vmem>>, %arg11: memref<32x8xf32, #tpu.memory_space<vmem>>) attributes {dimension_semantics = [#tpu.dimension_semantics<parallel>], iteration_bounds = array<i64: 8>, scalar_prefetch = 0 : i64, scratch_operands = 0 : i64, tpu.core_type = #tpu.core_type<tc>, window_params = [{transform_indices = @transform_0, window_bounds = array<i64: 32, 64>}, {pipeline_mode = #tpu.pipeline_mode<synchronous>, transform_indices = @transform_1, window_bounds = array<i64: 64, 16>}, {pipeline_mode = #tpu.pipeline_mode<synchronous>, transform_indices = @transform_2, window_bounds = array<i64: 1, 16>}, {pipeline_mode = #tpu.pipeline_mode<synchronous>, transform_indices = @transform_3, window_bounds = array<i64: 16, 8>}, {pipeline_mode = #tpu.pipeline_mode<synchronous>, transform_indices = @transform_4, window_bounds = array<i64: 1, 8>}, {pipeline_mode = #tpu.pipeline_mode<synchronous>, transform_indices = @transform_5, window_bounds = array<i64: 8, 16>}, {pipeline_mode = #tpu.pipeline_mode<synchronous>, transform_indices = @transform_6, window_bounds = array<i64: 1, 16>}, {pipeline_mode = #tpu.pipeline_mode<synchronous>, transform_indices = @transform_7, window_bounds = array<i64: 16, 64>}, {pipeline_mode = #tpu.pipeline_mode<synchronous>, transform_indices = @transform_8, window_bounds = array<i64: 1, 64>}, {transform_indices = @transform_9, window_bounds = array<i64: 32, 64>}, {transform_indices = @transform_10, window_bounds = array<i64: 32, 8>}]} {
    %c0 = arith.constant 0 : index
    %c0_0 = arith.constant 0 : index
    %0 = vector.load %arg1[%c0, %c0_0] : memref<32x64xbf16, #tpu.memory_space<vmem>>, vector<32x64xbf16>
    %c0_1 = arith.constant 0 : index
    %c0_2 = arith.constant 0 : index
    %1 = vector.load %arg2[%c0_1, %c0_2] : memref<64x16xbf16, #tpu.memory_space<vmem>>, vector<64x16xbf16>
    %cst = arith.constant dense<0.000000e+00> : vector<32x16xf32>
    %2 = tpu.matmul %0, %1, %cst {dimension_numbers = #tpu.dot_dimension_numbers<[1], [0], [0], [1], [0, 0, 1, 1], [], []>} : vector<32x64xbf16>, vector<64x16xbf16>, vector<32x16xf32> -> vector<32x16xf32>
    %c0_3 = arith.constant 0 : index
    %c0_4 = arith.constant 0 : index
    %3 = vector.load %arg3[%c0_3, %c0_4] : memref<1x16xbf16, #tpu.memory_space<vmem>>, vector<1x16xbf16>
    %4 = arith.extf %3 : vector<1x16xbf16> to vector<1x16xf32>
    %5 = vector.broadcast %4 : vector<1x16xf32> to vector<32x16xf32>
    %6 = arith.addf %2, %5 : vector<32x16xf32>
    %cst_5 = arith.constant 0.000000e+00 : f32
    %7 = vector.broadcast %cst_5 : f32 to vector<32x16xf32>
    %8 = arith.maximumf %6, %7 : vector<32x16xf32>
    %9 = arith.truncf %8 : vector<32x16xf32> to vector<32x16xbf16>
    %c0_6 = arith.constant 0 : index
    %c0_7 = arith.constant 0 : index
    %10 = vector.load %arg4[%c0_6, %c0_7] : memref<16x8xbf16, #tpu.memory_space<vmem>>, vector<16x8xbf16>
    %cst_8 = arith.constant dense<0.000000e+00> : vector<32x8xf32>
    %11 = tpu.matmul %9, %10, %cst_8 {dimension_numbers = #tpu.dot_dimension_numbers<[1], [0], [0], [1], [0, 0, 1, 1], [], []>} : vector<32x16xbf16>, vector<16x8xbf16>, vector<32x8xf32> -> vector<32x8xf32>
    %c0_9 = arith.constant 0 : index
    %c0_10 = arith.constant 0 : index
    %12 = vector.load %arg5[%c0_9, %c0_10] : memref<1x8xbf16, #tpu.memory_space<vmem>>, vector<1x8xbf16>
    %13 = arith.extf %12 : vector<1x8xbf16> to vector<1x8xf32>
    %14 = vector.broadcast %13 : vector<1x8xf32> to vector<32x8xf32>
    %15 = arith.addf %11, %14 : vector<32x8xf32>
    %cst_11 = arith.constant 0.000000e+00 : f32
    %16 = vector.broadcast %cst_11 : f32 to vector<32x8xf32>
    %17 = arith.maximumf %15, %16 : vector<32x8xf32>
    %18 = arith.truncf %17 : vector<32x8xf32> to vector<32x8xbf16>
    %c0_12 = arith.constant 0 : index
    %c0_13 = arith.constant 0 : index
    %19 = vector.load %arg6[%c0_12, %c0_13] : memref<8x16xbf16, #tpu.memory_space<vmem>>, vector<8x16xbf16>
    %cst_14 = arith.constant dense<0.000000e+00> : vector<32x16xf32>
    %20 = tpu.matmul %18, %19, %cst_14 {dimension_numbers = #tpu.dot_dimension_numbers<[1], [0], [0], [1], [0, 0, 1, 1], [], []>} : vector<32x8xbf16>, vector<8x16xbf16>, vector<32x16xf32> -> vector<32x16xf32>
    %c0_15 = arith.constant 0 : index
    %c0_16 = arith.constant 0 : index
    %21 = vector.load %arg7[%c0_15, %c0_16] : memref<1x16xbf16, #tpu.memory_space<vmem>>, vector<1x16xbf16>
    %22 = arith.extf %21 : vector<1x16xbf16> to vector<1x16xf32>
    %23 = vector.broadcast %22 : vector<1x16xf32> to vector<32x16xf32>
    %24 = arith.addf %20, %23 : vector<32x16xf32>
    %cst_17 = arith.constant 0.000000e+00 : f32
    %25 = vector.broadcast %cst_17 : f32 to vector<32x16xf32>
    %26 = arith.maximumf %24, %25 : vector<32x16xf32>
    %27 = arith.truncf %26 : vector<32x16xf32> to vector<32x16xbf16>
    %c0_18 = arith.constant 0 : index
    %c0_19 = arith.constant 0 : index
    %28 = vector.load %arg8[%c0_18, %c0_19] : memref<16x64xbf16, #tpu.memory_space<vmem>>, vector<16x64xbf16>
    %cst_20 = arith.constant dense<0.000000e+00> : vector<32x64xf32>
    %29 = tpu.matmul %27, %28, %cst_20 {dimension_numbers = #tpu.dot_dimension_numbers<[1], [0], [0], [1], [0, 0, 1, 1], [], []>} : vector<32x16xbf16>, vector<16x64xbf16>, vector<32x64xf32> -> vector<32x64xf32>
    %c0_21 = arith.constant 0 : index
    %c0_22 = arith.constant 0 : index
    %30 = vector.load %arg9[%c0_21, %c0_22] : memref<1x64xbf16, #tpu.memory_space<vmem>>, vector<1x64xbf16>
    %31 = arith.extf %30 : vector<1x64xbf16> to vector<1x64xf32>
    %32 = vector.broadcast %31 : vector<1x64xf32> to vector<32x64xf32>
    %33 = arith.addf %29, %32 : vector<32x64xf32>
    %34 = arith.negf %33 : vector<32x64xf32>
    %35 = math.exp %34 : vector<32x64xf32>
    %cst_23 = arith.constant 1.000000e+00 : f32
    %36 = vector.broadcast %cst_23 : f32 to vector<32x64xf32>
    %37 = arith.addf %36, %35 : vector<32x64xf32>
    %38 = arith.divf %36, %37 : vector<32x64xf32>
    %39 = arith.truncf %38 : vector<32x64xf32> to vector<32x64xbf16>
    %c0_24 = arith.constant 0 : index
    %c0_25 = arith.constant 0 : index
    %40 = vector.load %arg10[%c0_24, %c0_25] : memref<32x64xbf16, #tpu.memory_space<vmem>>, vector<32x64xbf16>
    tpu.vector_store %arg10[%c0_24, %c0_25], %39 {strides = array<i32>} : memref<32x64xbf16, #tpu.memory_space<vmem>>, vector<32x64xbf16>,
    %c0_26 = arith.constant 0 : index
    %c0_27 = arith.constant 0 : index
    %41 = vector.load %arg11[%c0_26, %c0_27] : memref<32x8xf32, #tpu.memory_space<vmem>>, vector<32x8xf32>
    tpu.vector_store %arg11[%c0_26, %c0_27], %17 {strides = array<i32>} : memref<32x8xf32, #tpu.memory_space<vmem>>, vector<32x8xf32>,
    return
  }
  func.func @transform_0(%arg0: i32) -> (i32, i32) {
    %c0_i32 = arith.constant 0 : i32
    %c0_i32_0 = arith.constant 0 : i32
    return %arg0, %c0_i32 : i32, i32
  }
  func.func @transform_1(%arg0: i32) -> (i32, i32) {
    %c0_i32 = arith.constant 0 : i32
    %c0_i32_0 = arith.constant 0 : i32
    %c0_i32_1 = arith.constant 0 : i32
    return %c0_i32, %c0_i32_0 : i32, i32
  }
  func.func @transform_2(%arg0: i32) -> (i32, i32) {
    %c0_i32 = arith.constant 0 : i32
    %c0_i32_0 = arith.constant 0 : i32
    %c0_i32_1 = arith.constant 0 : i32
    return %c0_i32, %c0_i32_0 : i32, i32
  }
  func.func @transform_3(%arg0: i32) -> (i32, i32) {
    %c0_i32 = arith.constant 0 : i32
    %c0_i32_0 = arith.constant 0 : i32
    %c0_i32_1 = arith.constant 0 : i32
    return %c0_i32, %c0_i32_0 : i32, i32
  }
  func.func @transform_4(%arg0: i32) -> (i32, i32) {
    %c0_i32 = arith.constant 0 : i32
    %c0_i32_0 = arith.constant 0 : i32
    %c0_i32_1 = arith.constant 0 : i32
    return %c0_i32, %c0_i32_0 : i32, i32
  }
  func.func @transform_5(%arg0: i32) -> (i32, i32) {
    %c0_i32 = arith.constant 0 : i32
    %c0_i32_0 = arith.constant 0 : i32
    %c0_i32_1 = arith.constant 0 : i32
    return %c0_i32, %c0_i32_0 : i32, i32
  }
  func.func @transform_6(%arg0: i32) -> (i32, i32) {
    %c0_i32 = arith.constant 0 : i32
    %c0_i32_0 = arith.constant 0 : i32
    %c0_i32_1 = arith.constant 0 : i32
    return %c0_i32, %c0_i32_0 : i32, i32
  }
  func.func @transform_7(%arg0: i32) -> (i32, i32) {
    %c0_i32 = arith.constant 0 : i32
    %c0_i32_0 = arith.constant 0 : i32
    %c0_i32_1 = arith.constant 0 : i32
    return %c0_i32, %c0_i32_0 : i32, i32
  }
  func.func @transform_8(%arg0: i32) -> (i32, i32) {
    %c0_i32 = arith.constant 0 : i32
    %c0_i32_0 = arith.constant 0 : i32
    %c0_i32_1 = arith.constant 0 : i32
    return %c0_i32, %c0_i32_0 : i32, i32
  }
  func.func @transform_9(%arg0: i32) -> (i32, i32) {
    %c0_i32 = arith.constant 0 : i32
    %c0_i32_0 = arith.constant 0 : i32
    return %arg0, %c0_i32 : i32, i32
  }
  func.func @transform_10(%arg0: i32) -> (i32, i32) {
    %c0_i32 = arith.constant 0 : i32
    %c0_i32_0 = arith.constant 0 : i32
    return %arg0, %c0_i32 : i32, i32
  }
}

</mosaic_0001>

<llo_original>
// kernel: tpu_custom_call.1
$region0: #{tpu_custom_call.1}
  #allocation0 [shape = 'u32[]', space=smem, size = 0x4, offset = 0x4, fixed_abs, tag = 'smem constant byte address 0x4 - core index']
  #allocation1 [shape = 'u32[144,128]{1,0:T(1,128)}', space=vmem, size = 0x12000, scoped, tag = 'internal scratch']
  %s0 = inlined_call_operand.vmem [shape: bf16[256,64], index: 0, kind: input, shape index: {}]
  %s1 = inlined_call_operand.vmem [shape: bf16[64,16], index: 1, kind: input, shape index: {}]
  %s2 = inlined_call_operand.vmem [shape: bf16[1,16], index: 2, kind: input, shape index: {}]
  %s3 = inlined_call_operand.vmem [shape: bf16[16,8], index: 3, kind: input, shape index: {}]
  %s4 = inlined_call_operand.vmem [shape: bf16[1,8], index: 4, kind: input, shape index: {}]
  %s5 = inlined_call_operand.vmem [shape: bf16[8,16], index: 5, kind: input, shape index: {}]
  %s6 = inlined_call_operand.vmem [shape: bf16[1,16], index: 6, kind: input, shape index: {}]
  %s7 = inlined_call_operand.vmem [shape: bf16[16,64], index: 7, kind: input, shape index: {}]
  %s8 = inlined_call_operand.vmem [shape: bf16[1,64], index: 8, kind: input, shape index: {}]
  %s9 = inlined_call_operand.vmem [shape: bf16[256,64], index: 9, kind: output, shape index: {0}]
  %s10 = inlined_call_operand.vmem [shape: f32[256,8], index: 10, kind: output, shape index: {1}]
  %11 = xla_tuple %s9, %s10
  %s12 = sld [smem:[#allocation0]]
  $region77: #{tpu_custom_call.1} parent=0
    _
  %s14 = ssub.s32 1, %s12
  %s15 = scalar_select 0, %s14, %s12
  loop: start=0, step=1, limit=10
  $region2: #{tpu_custom_call.1} parent=0 // loop_pre_header
    _
  $region3: #{tpu_custom_call.1} parent=0 // loop_header
    %s17 = sphi 0, %s21
    %p18 = scmp.ge.s32.totalorder %s17, 10
    %s27 = sphi 0, %s29
    %s30 = sphi 0, %s27
    %s31 = sphi 0, %s30
    %s47 = sphi 0, %s31
    %s51 = sphi 0, %s51
    %s53 = sphi 0, %s51
    %s54 = sphi 0, %s53
    %s68 = sphi 0, %s54
    %s72 = sphi 0, %s72
    %s74 = sphi 0, %s72
    %s75 = sphi 0, %s74
    %s89 = sphi 0, %s75
    %s93 = sphi 0, %s93
    %s95 = sphi 0, %s93
    %s96 = sphi 0, %s95
    %s110 = sphi 0, %s96
    %s114 = sphi 0, %s114
    %s116 = sphi 0, %s114
    %s117 = sphi 0, %s116
    %s131 = sphi 0, %s117
    %s135 = sphi 0, %s135
    %s137 = sphi 0, %s135
    %s138 = sphi 0, %s137
    %s152 = sphi 0, %s138
    %s156 = sphi 0, %s156
    %s158 = sphi 0, %s156
    %s159 = sphi 0, %s158
    %s173 = sphi 0, %s159
    %s177 = sphi 0, %s177
    %s179 = sphi 0, %s177
    %s180 = sphi 0, %s179
    %s194 = sphi 0, %s180
    %s198 = sphi 0, %s198
    %s200 = sphi 0, %s198
    %s201 = sphi 0, %s200
    %s215 = sphi 0, %s201
    %s221 = sphi 0, %s223
    %s224 = sphi 0, %s221
    %s225 = sphi 0, %s224
    %s241 = sphi 0, %s225
    %s247 = sphi 0, %s249
    %s250 = sphi 0, %s247
    %s251 = sphi 0, %s250
    %s267 = sphi 0, %s251
  $region4: #{tpu_custom_call.1} parent=0 // loop_header_branch
    %20 = sbr.rel (%p18) target = $region8
  $region5: #{tpu_custom_call.1} parent=0 // loop_body
    %s22 = ssub.s32 %s17, 1
    %s23 = ssub.s32 %s17, 2
    %s24 = sadd.s32 %s17, 1
    %s25 = ssub.s32 %s17, %s24
    %p26 = scmp.eq.s32.totalorder %s25, 0
    %s28 = sadd.s32 %s27, 1
    %s29 = scalar_select %p26, %s27, %s28
    %p32 = pneg %p26
    %p33 = scmp.eq.s32.totalorder %s17, 7
    %p34 = por %p32, %p33
    %p35 = scmp.ne.s32.totalorder %s27, %s30
    %p36 = scmp.eq.s32.totalorder %s17, 0
    %p37 = por %p35, %p36
    %p38 = scmp.ne.s32.totalorder %s27, %s30
    %p39 = scmp.eq.s32.totalorder %s22, 7
    %p40 = por %p38, %p39
    %p41 = scmp.ne.s32.totalorder %s30, %s31
    %p42 = scmp.eq.s32.totalorder %s22, 0
    %p43 = por %p41, %p42
    %p44 = scmp.ne.s32.totalorder %s30, %s31
    %p45 = scmp.eq.s32.totalorder %s23, 7
    %p46 = por %p44, %p45
    %p48 = scmp.ne.s32.totalorder %s31, %s47
    %p49 = scmp.eq.s32.totalorder %s23, 0
    %p50 = por %p48, %p49
    %s52 = sadd.s32 %s51, 1
    %p55 = scmp.eq.s32.totalorder %s17, 7
    %p56 = scmp.ne.s32.totalorder %s51, %s53
    %p57 = scmp.eq.s32.totalorder %s17, 0
    %p58 = por %p56, %p57
    %p59 = scmp.ne.s32.totalorder %s51, %s53
    %p60 = scmp.eq.s32.totalorder %s22, 7
    %p61 = por %p59, %p60
    %p62 = scmp.ne.s32.totalorder %s53, %s54
    %p63 = scmp.eq.s32.totalorder %s22, 0
    %p64 = por %p62, %p63
    %p65 = scmp.ne.s32.totalorder %s53, %s54
    %p66 = scmp.eq.s32.totalorder %s23, 7
    %p67 = por %p65, %p66
    %p69 = scmp.ne.s32.totalorder %s54, %s68
    %p70 = scmp.eq.s32.totalorder %s23, 0
    %p71 = por %p69, %p70
    %s73 = sadd.s32 %s72, 1
    %p76 = scmp.eq.s32.totalorder %s17, 7
    %p77 = scmp.ne.s32.totalorder %s72, %s74
    %p78 = scmp.eq.s32.totalorder %s17, 0
    %p79 = por %p77, %p78
    %p80 = scmp.ne.s32.totalorder %s72, %s74
    %p81 = scmp.eq.s32.totalorder %s22, 7
    %p82 = por %p80, %p81
    %p83 = scmp.ne.s32.totalorder %s74, %s75
    %p84 = scmp.eq.s32.totalorder %s22, 0
    %p85 = por %p83, %p84
    %p86 = scmp.ne.s32.totalorder %s74, %s75
    %p87 = scmp.eq.s32.totalorder %s23, 7
    %p88 = por %p86, %p87
    %p90 = scmp.ne.s32.totalorder %s75, %s89
    %p91 = scmp.eq.s32.totalorder %s23, 0
    %p92 = por %p90, %p91
    %s94 = sadd.s32 %s93, 1
    %p97 = scmp.eq.s32.totalorder %s17, 7
    %p98 = scmp.ne.s32.totalorder %s93, %s95
    %p99 = scmp.eq.s32.totalorder %s17, 0
    %p100 = por %p98, %p99
    %p101 = scmp.ne.s32.totalorder %s93, %s95
    %p102 = scmp.eq.s32.totalorder %s22, 7
    %p103 = por %p101, %p102
    %p104 = scmp.ne.s32.totalorder %s95, %s96
    %p105 = scmp.eq.s32.totalorder %s22, 0
    %p106 = por %p104, %p105
    %p107 = scmp.ne.s32.totalorder %s95, %s96
    %p108 = scmp.eq.s32.totalorder %s23, 7
    %p109 = por %p107, %p108
    %p111 = scmp.ne.s32.totalorder %s96, %s110
    %p112 = scmp.eq.s32.totalorder %s23, 0
    %p113 = por %p111, %p112
    %s115 = sadd.s32 %s114, 1
    %p118 = scmp.eq.s32.totalorder %s17, 7
    %p119 = scmp.ne.s32.totalorder %s114, %s116
    %p120 = scmp.eq.s32.totalorder %s17, 0
    %p121 = por %p119, %p120
    %p122 = scmp.ne.s32.totalorder %s114, %s116
    %p123 = scmp.eq.s32.totalorder %s22, 7
    %p124 = por %p122, %p123
    %p125 = scmp.ne.s32.totalorder %s116, %s117
    %p126 = scmp.eq.s32.totalorder %s22, 0
    %p127 = por %p125, %p126
    %p128 = scmp.ne.s32.totalorder %s116, %s117
    %p129 = scmp.eq.s32.totalorder %s23, 7
    %p130 = por %p128, %p129
    %p132 = scmp.ne.s32.totalorder %s117, %s131
    %p133 = scmp.eq.s32.totalorder %s23, 0
    %p134 = por %p132, %p133
    %s136 = sadd.s32 %s135, 1
    %p139 = scmp.eq.s32.totalorder %s17, 7
    %p140 = scmp.ne.s32.totalorder %s135, %s137
    %p141 = scmp.eq.s32.totalorder %s17, 0
    %p142 = por %p140, %p141
    %p143 = scmp.ne.s32.totalorder %s135, %s137
    %p144 = scmp.eq.s32.totalorder %s22, 7
    %p145 = por %p143, %p144
    %p146 = scmp.ne.s32.totalorder %s137, %s138
    %p147 = scmp.eq.s32.totalorder %s22, 0
    %p148 = por %p146, %p147
    %p149 = scmp.ne.s32.totalorder %s137, %s138
    %p150 = scmp.eq.s32.totalorder %s23, 7
    %p151 = por %p149, %p150
    %p153 = scmp.ne.s32.totalorder %s138, %s152
    %p154 = scmp.eq.s32.totalorder %s23, 0
    %p155 = por %p153, %p154
    %s157 = sadd.s32 %s156, 1
    %p160 = scmp.eq.s32.totalorder %s17, 7
    %p161 = scmp.ne.s32.totalorder %s156, %s158
    %p162 = scmp.eq.s32.totalorder %s17, 0
    %p163 = por %p161, %p162
    %p164 = scmp.ne.s32.totalorder %s156, %s158
    %p165 = scmp.eq.s32.totalorder %s22, 7
    %p166 = por %p164, %p165
    %p167 = scmp.ne.s32.totalorder %s158, %s159
    %p168 = scmp.eq.s32.totalorder %s22, 0
    %p169 = por %p167, %p168
    %p170 = scmp.ne.s32.totalorder %s158, %s159
    %p171 = scmp.eq.s32.totalorder %s23, 7
    %p172 = por %p170, %p171
    %p174 = scmp.ne.s32.totalorder %s159, %s173
    %p175 = scmp.eq.s32.totalorder %s23, 0
    %p176 = por %p174, %p175
    %s178 = sadd.s32 %s177, 1
    %p181 = scmp.eq.s32.totalorder %s17, 7
    %p182 = scmp.ne.s32.totalorder %s177, %s179
    %p183 = scmp.eq.s32.totalorder %s17, 0
    %p184 = por %p182, %p183
    %p185 = scmp.ne.s32.totalorder %s177, %s179
    %p186 = scmp.eq.s32.totalorder %s22, 7
    %p187 = por %p185, %p186
    %p188 = scmp.ne.s32.totalorder %s179, %s180
    %p189 = scmp.eq.s32.totalorder %s22, 0
    %p190 = por %p188, %p189
    %p191 = scmp.ne.s32.totalorder %s179, %s180
    %p192 = scmp.eq.s32.totalorder %s23, 7
    %p193 = por %p191, %p192
    %p195 = scmp.ne.s32.totalorder %s180, %s194
    %p196 = scmp.eq.s32.totalorder %s23, 0
    %p197 = por %p195, %p196
    %s199 = sadd.s32 %s198, 1
    %p202 = scmp.eq.s32.totalorder %s17, 7
    %p203 = scmp.ne.s32.totalorder %s198, %s200
    %p204 = scmp.eq.s32.totalorder %s17, 0
    %p205 = por %p203, %p204
    %p206 = scmp.ne.s32.totalorder %s198, %s200
    %p207 = scmp.eq.s32.totalorder %s22, 7
    %p208 = por %p206, %p207
    %p209 = scmp.ne.s32.totalorder %s200, %s201
    %p210 = scmp.eq.s32.totalorder %s22, 0
    %p211 = por %p209, %p210
    %p212 = scmp.ne.s32.totalorder %s200, %s201
    %p213 = scmp.eq.s32.totalorder %s23, 7
    %p214 = por %p212, %p213
    %p216 = scmp.ne.s32.totalorder %s201, %s215
    %p217 = scmp.eq.s32.totalorder %s23, 0
    %p218 = por %p216, %p217
    %s219 = ssub.s32 %s17, %s24
    %p220 = scmp.eq.s32.totalorder %s219, 0
    %s222 = sadd.s32 %s221, 1
    %s223 = scalar_select %p220, %s221, %s222
    %p226 = pneg %p220
    %p227 = scmp.eq.s32.totalorder %s17, 7
    %p228 = por %p226, %p227
    %p229 = scmp.ne.s32.totalorder %s221, %s224
    %p230 = scmp.eq.s32.totalorder %s17, 0
    %p231 = por %p229, %p230
    %p232 = scmp.ne.s32.totalorder %s221, %s224
    %p233 = scmp.eq.s32.totalorder %s22, 7
    %p234 = por %p232, %p233
    %p235 = scmp.ne.s32.totalorder %s224, %s225
    %p236 = scmp.eq.s32.totalorder %s22, 0
    %p237 = por %p235, %p236
    %p238 = scmp.ne.s32.totalorder %s224, %s225
    %p239 = scmp.eq.s32.totalorder %s23, 7
    %p240 = por %p238, %p239
    %p242 = scmp.ne.s32.totalorder %s225, %s241
    %p243 = scmp.eq.s32.totalorder %s23, 0
    %p244 = por %p242, %p243
    %s245 = ssub.s32 %s17, %s24
    %p246 = scmp.eq.s32.totalorder %s245, 0
    %s248 = sadd.s32 %s247, 1
    %s249 = scalar_select %p246, %s247, %s248
    %p252 = pneg %p246
    %p253 = scmp.eq.s32.totalorder %s17, 7
    %p254 = por %p252, %p253
    %p255 = scmp.ne.s32.totalorder %s247, %s250
    %p256 = scmp.eq.s32.totalorder %s17, 0
    %p257 = por %p255, %p256
    %p258 = scmp.ne.s32.totalorder %s247, %s250
    %p259 = scmp.eq.s32.totalorder %s22, 7
    %p260 = por %p258, %p259
    %p261 = scmp.ne.s32.totalorder %s250, %s251
    %p262 = scmp.eq.s32.totalorder %s22, 0
    %p263 = por %p261, %p262
    %p264 = scmp.ne.s32.totalorder %s250, %s251
    %p265 = scmp.eq.s32.totalorder %s23, 7
    %p266 = por %p264, %p265
    %p268 = scmp.ne.s32.totalorder %s251, %s267
    %p269 = scmp.eq.s32.totalorder %s23, 0
    %p270 = por %p268, %p269
    %p271 = scmp.le.s32.totalorder 1, %s17
    %p272 = scmp.lt.s32.totalorder %s17, 9
    %p273 = pnand %p271, %p272
    %p274 = pneg %p273
    // Predicated region
    $region9: #{tpu_custom_call.1} parent=5 // pred_check
      _
    $region10: #{tpu_custom_call.1} parent=5 // pred_check_branch
      %276 = sbr.rel (%p273) target = $region12
    $region11: #{tpu_custom_call.1} parent=5 // pred_region
      %s277 = ssub.s32 %s17, 1
      // Predicated region
      $region13: #{tpu_custom_call.1} parent=11 // pred_check
        %p278 = pneg %p64
      $region14: #{tpu_custom_call.1} parent=11 // pred_check_branch
        %280 = sbr.rel (%p278) target = $region16
      $region15: #{tpu_custom_call.1} parent=11 // pred_region
        _
      $region16: #{tpu_custom_call.1} parent=11 // pred_fallthru
        _
      // Predicated region
      $region17: #{tpu_custom_call.1} parent=11 // pred_check
        %p281 = pneg %p85
      $region18: #{tpu_custom_call.1} parent=11 // pred_check_branch
        %283 = sbr.rel (%p281) target = $region20
      $region19: #{tpu_custom_call.1} parent=11 // pred_region
        _
      $region20: #{tpu_custom_call.1} parent=11 // pred_fallthru
        _
      // Predicated region
      $region21: #{tpu_custom_call.1} parent=11 // pred_check
        %p284 = pneg %p106
      $region22: #{tpu_custom_call.1} parent=11 // pred_check_branch
        %286 = sbr.rel (%p284) target = $region24
      $region23: #{tpu_custom_call.1} parent=11 // pred_region
        _
      $region24: #{tpu_custom_call.1} parent=11 // pred_fallthru
        _
      // Predicated region
      $region25: #{tpu_custom_call.1} parent=11 // pred_check
        %p287 = pneg %p127
      $region26: #{tpu_custom_call.1} parent=11 // pred_check_branch
        %289 = sbr.rel (%p287) target = $region28
      $region27: #{tpu_custom_call.1} parent=11 // pred_region
        _
      $region28: #{tpu_custom_call.1} parent=11 // pred_fallthru
        _
      // Predicated region
      $region29: #{tpu_custom_call.1} parent=11 // pred_check
        %p290 = pneg %p148
      $region30: #{tpu_custom_call.1} parent=11 // pred_check_branch
        %292 = sbr.rel (%p290) target = $region32
      $region31: #{tpu_custom_call.1} parent=11 // pred_region
        _
      $region32: #{tpu_custom_call.1} parent=11 // pred_fallthru
        _
      // Predicated region
      $region33: #{tpu_custom_call.1} parent=11 // pred_check
        %p293 = pneg %p169
      $region34: #{tpu_custom_call.1} parent=11 // pred_check_branch
        %295 = sbr.rel (%p293) target = $region36
      $region35: #{tpu_custom_call.1} parent=11 // pred_region
        _
      $region36: #{tpu_custom_call.1} parent=11 // pred_fallthru
        _
      // Predicated region
      $region37: #{tpu_custom_call.1} parent=11 // pred_check
        %p296 = pneg %p190
      $region38: #{tpu_custom_call.1} parent=11 // pred_check_branch
        %298 = sbr.rel (%p296) target = $region40
      $region39: #{tpu_custom_call.1} parent=11 // pred_region
        _
      $region40: #{tpu_custom_call.1} parent=11 // pred_fallthru
        _
      // Predicated region
      $region41: #{tpu_custom_call.1} parent=11 // pred_check
        %p299 = pneg %p211
      $region42: #{tpu_custom_call.1} parent=11 // pred_check_branch
        %301 = sbr.rel (%p299) target = $region44
      $region43: #{tpu_custom_call.1} parent=11 // pred_region
        _
      $region44: #{tpu_custom_call.1} parent=11 // pred_fallthru
        _
    $region12: #{tpu_custom_call.1} parent=5 // pred_fallthru
      _
    %p302 = scmp.lt.s32.totalorder %s17, 8
    // Predicated region
    $region45: #{tpu_custom_call.1} parent=5 // pred_check
      %p303 = pneg %p302
    $region46: #{tpu_custom_call.1} parent=5 // pred_check_branch
      %305 = sbr.rel (%p303) target = $region48
    $region47: #{tpu_custom_call.1} parent=5 // pred_region
      // Predicated region
      $region49: #{tpu_custom_call.1} parent=47 // pred_check
        %p306 = pneg %p37
      $region50: #{tpu_custom_call.1} parent=47 // pred_check_branch
        %308 = sbr.rel (%p306) target = $region52
      $region51: #{tpu_custom_call.1} parent=47 // pred_region
        %s309 = smul.u32 4, %s17
        %p310 = scmp.lt.s32.totalorder %s309, 31
        %s311 = scalar_select %p310, %s309, 31
        %s312 = smul.addr %s311, 4
        %s313 = scalar_lea.vmem %s0, %s312
        %s314 = smul.u32 4, %s17
      $region52: #{tpu_custom_call.1} parent=47 // pred_fallthru
        _
    $region48: #{tpu_custom_call.1} parent=5 // pred_fallthru
      _
    %p315 = scmp.le.s32.totalorder 1, %s17
    %p316 = scmp.lt.s32.totalorder %s17, 9
    %p317 = pnand %p315, %p316
    %p318 = pneg %p317
    // Predicated region
    $region53: #{tpu_custom_call.1} parent=5 // pred_check
      _
    $region54: #{tpu_custom_call.1} parent=5 // pred_check_branch
      %320 = sbr.rel (%p317) target = $region56
    $region55: #{tpu_custom_call.1} parent=5 // pred_region
      %s321 = ssub.s32 %s17, 1
      %s322 = smul.u32 4, %s22
      %p323 = scmp.lt.s32.totalorder %s322, 31
      %s324 = scalar_select %p323, %s322, 31
      %s325 = smul.addr %s324, 4
      %s326 = scalar_lea.vmem %s0, %s325
      %p327 = pneg %p43
      %p328 = pneg %p40
      %p329 = pneg %p64
      %p330 = pneg %p61
      %p331 = pneg %p85
      %p332 = pneg %p82
      %p333 = pneg %p106
      %p334 = pneg %p103
      %p335 = pneg %p127
      %p336 = pneg %p124
      %p337 = pneg %p148
      %p338 = pneg %p145
      %p339 = pneg %p169
      %p340 = pneg %p166
      %p341 = pneg %p190
      %p342 = pneg %p187
      %p343 = pneg %p211
      %p344 = pneg %p208
      %p345 = pneg %p237
      %p346 = pneg %p234
      %s347 = smul.u32 4, %s22
      %p348 = scmp.lt.s32.totalorder %s347, 31
      %s349 = scalar_select %p348, %s347, 31
      %s350 = smul.addr %s349, 4
      %s351 = scalar_lea.vmem %s9, %s350
      %p352 = pneg %p263
      %p353 = pneg %p260
      %s354 = smul.u32 4, %s22
      %p355 = scmp.lt.s32.totalorder %s354, 31
      %s356 = scalar_select %p355, %s354, 31
      %s357 = smul.addr %s356, 8
      %s358 = scalar_lea.vmem %s10, %s357
      %s359 = smul.u32 4, %s22
      %p360 = scmp.lt.s32.totalorder %s359, 31
      %s361 = scalar_select %p360, %s359, 31
      %s362 = smul.addr %s361, 4
      %s363 = scalar_lea.vmem %s0, %s362
      %s364 = smul.u32 4, %s22
      %s365 = smul.u32 4, %s22
      %p366 = scmp.lt.s32.totalorder %s365, 31
      %s367 = scalar_select %p366, %s365, 31
      %s368 = smul.addr %s367, 4
      %s369 = scalar_lea.vmem %s9, %s368
      %s370 = smul.u32 4, %s22
      %s371 = smul.u32 4, %s22
      %p372 = scmp.lt.s32.totalorder %s371, 31
      %s373 = scalar_select %p372, %s371, 31
      %s374 = smul.addr %s373, 8
      %s375 = scalar_lea.vmem %s10, %s374
      %s376 = smul.u32 4, %s22
      %v378 = vld [vmem:[%s363] sm:$0xf]
      %v379 = vld [vmem:[%s363 + $0x4] sm:$0xf]
      %v380 = vld [vmem:[%s363 + $0x8] sm:$0xf]
      %v381 = vld [vmem:[%s363 + $0xc] sm:$0xf]
      %v382 = vld [vmem:[%s1] sm:$0xf]
      %v383 = vld [vmem:[%s1 + $0x4] sm:$0xf]
      %v384 = vld [vmem:[%s1 + $0x8] sm:$0xf]
      %v385 = vld [vmem:[%s1 + $0xc] sm:$0xf]
      %v386 = vld [vmem:[%s1 + $0x10] sm:$0xf]
      %v387 = vld [vmem:[%s1 + $0x14] sm:$0xf]
      %v388 = vld [vmem:[%s1 + $0x18] sm:$0xf]
      %v389 = vld [vmem:[%s1 + $0x1c] sm:$0xf]
      %v390 = vld [vmem:[%s2] sm:$0x1]
      %v391 = vunpack.c.l.bf16 %v390
      %v392 = vlaneseq
      %v393 = vshrl.u32 %v392, 7
      %v394 = vsub.s32 0, %v393
      %v395 = vrot.slane %v391, %v394
      %v400 = vunpack.c.l.b16 %v378
      %v401 = vunpack.c.l.b16 %v379
      %v402 = vunpack.c.l.b16 %v380
      %v403 = vunpack.c.l.b16 %v381
      %v404 = vpack.c.b16 %v401, %v400
      %v405 = vpack.c.b16 %v403, %v402
      %v414 = vunpack.c.l.b16 %v382
      %v415 = vunpack.c.l.b16 %v383
      %v416 = vunpack.c.l.b16 %v384
      %v417 = vunpack.c.l.b16 %v385
      %v418 = vunpack.c.l.b16 %v386
      %v419 = vunpack.c.l.b16 %v387
      %v420 = vunpack.c.l.b16 %v388
      %v421 = vunpack.c.l.b16 %v389
      %v422 = vpack.c.b16 %v415, %v414
      %v423 = vpack.c.b16 %v417, %v416
      %v424 = vpack.c.b16 %v419, %v418
      %v425 = vpack.c.b16 %v421, %v420
      %vm430 = vcmask 523264
      %v432 = vsel %vm430, %v404, 0
      %v435 = vsel %vm430, %v405, 0
      %437 = vmatprep.subr.bf16.mxu0 0
      %438 = vmatpush1.bf16.msra.mxu0 %v422
      %439 = vmatprep.subr.bf16.mxu0 0
      %440 = vmatpush1.bf16.msra.mxu0 %v423
      %441 = vmatprep.subr.bf16.mxu0 0
      %442 = vmatpush1.bf16.msra.mxu0 %v424
      %443 = vmatprep.subr.bf16.mxu0 0
      %444 = vmatpush1.bf16.msra.mxu0 %v425
      %445 = vmatprep.subr.bf16.mxu0 0
      %446 = vmatpush1.bf16.msra.mxu0 0
      %447 = vmatprep.subr.bf16.mxu0 0
      %448 = vmatpush1.bf16.msra.mxu0 0
      %449 = vmatprep.subr.bf16.mxu0 0
      %450 = vmatpush1.bf16.msra.mxu0 0
      %451 = vmatprep.subr.bf16.mxu0 0
      %452 = vmatpush1.bf16.msra.mxu0 0
      %453 = vmatprep.subr.bf16.mxu0 0
      %454 = vmatpush1.bf16.msra.mxu0 0
      %455 = vmatprep.subr.bf16.mxu0 0
      %456 = vmatpush1.bf16.msra.mxu0 0
      %457 = vmatprep.subr.bf16.mxu0 0
      %458 = vmatpush1.bf16.msra.mxu0 0
      %459 = vmatprep.subr.bf16.mxu0 0
      %460 = vmatpush1.bf16.msra.mxu0 0
      %461 = vmatprep.subr.bf16.mxu0 0
      %462 = vmatpush1.bf16.msra.mxu0 0
      %463 = vmatprep.subr.bf16.mxu0 0
      %464 = vmatpush1.bf16.msra.mxu0 0
      %465 = vmatprep.subr.bf16.mxu0 0
      %466 = vmatpush1.bf16.msra.mxu0 0
      %467 = vmatprep.subr.bf16.mxu0 0
      %468 = vmatpush1.bf16.msra.mxu0 0
      %469 = vmatprep.mubr.bf16.mxu0 0
      %470 = vmatmul.mubr.bf16.gmra.mrb[0].mxu0 %v432
      %v471 = vpop.f32.mrb[0].mxu0
      %v472 = vadd.f32 %v395, %v471
      %v473 = vpop.f32.mrb[0].mxu0
      %v474 = vpop.f32.mrb[0].mxu0
      %v475 = vadd.f32 %v395, %v474
      %v476 = vpop.f32.mrb[0].mxu0
      %477 = vmatprep.mubr.bf16.mxu0 0
      %478 = vmatmul.mubr.bf16.gmra.mrb[0].mxu0 %v435
      %v479 = vpop.f32.mrb[0].mxu0
      %v480 = vadd.f32 %v395, %v479
      %v481 = vpop.f32.mrb[0].mxu0
      %v482 = vpop.f32.mrb[0].mxu0
      %v483 = vadd.f32 %v395, %v482
      %v484 = vpop.f32.mrb[0].mxu0
      %485 = vdwg.mxu0
      %v486 = vmax.f32 %v472, 0.0
      %v487 = vmax.f32 %v475, 0.0
      %v488 = vmax.f32 %v480, 0.0
      %v489 = vmax.f32 %v483, 0.0
      %v490 = vpack.c.bf16 %v487, %v486
      %v491 = vpack.c.bf16 %v489, %v488
      %v492 = vld [vmem:[%s3] sm:$0xf]
      %v493 = vld [vmem:[%s3 + $0x4] sm:$0xf]
      %v494 = vld [vmem:[%s4] sm:$0x1]
      %v495 = vunpack.c.l.bf16 %v494
      %v496 = vlaneseq
      %v497 = vshrl.u32 %v496, 7
      %v498 = vsub.s32 0, %v497
      %v499 = vrot.slane %v495, %v498
      %v502 = vunpack.c.l.b16 %v492
      %v503 = vunpack.c.l.b16 %v493
      %v504 = vpack.c.b16 %v503, %v502
      %vm506 = vcmask 130048
      %v508 = vsel %vm506, %v490, 0
      %v511 = vsel %vm506, %v491, 0
      %513 = vmatprep.subr.bf16.mxu0 0
      %514 = vmatpush1.bf16.msra.mxu0 %v504
      %515 = vmatprep.subr.bf16.mxu0 0
      %516 = vmatpush1.bf16.msra.mxu0 0
      %517 = vmatprep.subr.bf16.mxu0 0
      %518 = vmatpush1.bf16.msra.mxu0 0
      %519 = vmatprep.subr.bf16.mxu0 0
      %520 = vmatpush1.bf16.msra.mxu0 0
      %521 = vmatprep.subr.bf16.mxu0 0
      %522 = vmatpush1.bf16.msra.mxu0 0
      %523 = vmatprep.subr.bf16.mxu0 0
      %524 = vmatpush1.bf16.msra.mxu0 0
      %525 = vmatprep.subr.bf16.mxu0 0
      %526 = vmatpush1.bf16.msra.mxu0 0
      %527 = vmatprep.subr.bf16.mxu0 0
      %528 = vmatpush1.bf16.msra.mxu0 0
      %529 = vmatprep.subr.bf16.mxu0 0
      %530 = vmatpush1.bf16.msra.mxu0 0
      %531 = vmatprep.subr.bf16.mxu0 0
      %532 = vmatpush1.bf16.msra.mxu0 0
      %533 = vmatprep.subr.bf16.mxu0 0
      %534 = vmatpush1.bf16.msra.mxu0 0
      %535 = vmatprep.subr.bf16.mxu0 0
      %536 = vmatpush1.bf16.msra.mxu0 0
      %537 = vmatprep.subr.bf16.mxu0 0
      %538 = vmatpush1.bf16.msra.mxu0 0
      %539 = vmatprep.subr.bf16.mxu0 0
      %540 = vmatpush1.bf16.msra.mxu0 0
      %541 = vmatprep.subr.bf16.mxu0 0
      %542 = vmatpush1.bf16.msra.mxu0 0
      %543 = vmatprep.subr.bf16.mxu0 0
      %544 = vmatpush1.bf16.msra.mxu0 0
      %545 = vmatprep.mubr.bf16.mxu0 0
      %546 = vmatmul.mubr.bf16.gmra.mrb[0].mxu0 %v508
      %v547 = vpop.f32.mrb[0].mxu0
      %v548 = vadd.f32 %v499, %v547
      %v549 = vpop.f32.mrb[0].mxu0
      %v550 = vpop.f32.mrb[0].mxu0
      %v551 = vadd.f32 %v499, %v550
      %v552 = vpop.f32.mrb[0].mxu0
      %553 = vmatprep.mubr.bf16.mxu0 0
      %554 = vmatmul.mubr.bf16.gmra.mrb[0].mxu0 %v511
      %v555 = vpop.f32.mrb[0].mxu0
      %v556 = vadd.f32 %v499, %v555
      %v557 = vpop.f32.mrb[0].mxu0
      %v558 = vpop.f32.mrb[0].mxu0
      %v559 = vadd.f32 %v499, %v558
      %v560 = vpop.f32.mrb[0].mxu0
      %561 = vdwg.mxu0
      %v562 = vmax.f32 %v548, 0.0
      %v563 = vmax.f32 %v551, 0.0
      %v564 = vmax.f32 %v556, 0.0
      %v565 = vmax.f32 %v559, 0.0
      %v566 = vpack.c.bf16 %v563, %v562
      %v567 = vpack.c.bf16 %v565, %v564
      %v568 = vld [vmem:[%s5] sm:$0xf]
      %v569 = vld [vmem:[%s6] sm:$0x1]
      %v570 = vunpack.c.l.bf16 %v569
      %v571 = vlaneseq
      %v572 = vshrl.u32 %v571, 7
      %v573 = vsub.s32 0, %v572
      %v574 = vrot.slane %v570, %v573
      %vm575 = vcmask 64512
      %v577 = vsel %vm575, %v566, 0
      %v580 = vsel %vm575, %v567, 0
      %vm582 = vcmask 1043456
      %v584 = vsel %vm582, %v568, 0
      %586 = vmatprep.subr.bf16.mxu0 0
      %587 = vmatpush1.bf16.msra.mxu0 %v584
      %588 = vmatprep.subr.bf16.mxu0 0
      %589 = vmatpush1.bf16.msra.mxu0 0
      %590 = vmatprep.subr.bf16.mxu0 0
      %591 = vmatpush1.bf16.msra.mxu0 0
      %592 = vmatprep.subr.bf16.mxu0 0
      %593 = vmatpush1.bf16.msra.mxu0 0
      %594 = vmatprep.subr.bf16.mxu0 0
      %595 = vmatpush1.bf16.msra.mxu0 0
      %596 = vmatprep.subr.bf16.mxu0 0
      %597 = vmatpush1.bf16.msra.mxu0 0
      %598 = vmatprep.subr.bf16.mxu0 0
      %599 = vmatpush1.bf16.msra.mxu0 0
      %600 = vmatprep.subr.bf16.mxu0 0
      %601 = vmatpush1.bf16.msra.mxu0 0
      %602 = vmatprep.subr.bf16.mxu0 0
      %603 = vmatpush1.bf16.msra.mxu0 0
      %604 = vmatprep.subr.bf16.mxu0 0
      %605 = vmatpush1.bf16.msra.mxu0 0
      %606 = vmatprep.subr.bf16.mxu0 0
      %607 = vmatpush1.bf16.msra.mxu0 0
      %608 = vmatprep.subr.bf16.mxu0 0
      %609 = vmatpush1.bf16.msra.mxu0 0
      %610 = vmatprep.subr.bf16.mxu0 0
      %611 = vmatpush1.bf16.msra.mxu0 0
      %612 = vmatprep.subr.bf16.mxu0 0
      %613 = vmatpush1.bf16.msra.mxu0 0
      %614 = vmatprep.subr.bf16.mxu0 0
      %615 = vmatpush1.bf16.msra.mxu0 0
      %616 = vmatprep.subr.bf16.mxu0 0
      %617 = vmatpush1.bf16.msra.mxu0 0
      %618 = vmatprep.mubr.bf16.mxu0 0
      %619 = vmatmul.mubr.bf16.gmra.mrb[0].mxu0 %v577
      %v620 = vpop.f32.mrb[0].mxu0
      %v621 = vadd.f32 %v574, %v620
      %v622 = vpop.f32.mrb[0].mxu0
      %v623 = vpop.f32.mrb[0].mxu0
      %v624 = vadd.f32 %v574, %v623
      %v625 = vpop.f32.mrb[0].mxu0
      %626 = vmatprep.mubr.bf16.mxu0 0
      %627 = vmatmul.mubr.bf16.gmra.mrb[0].mxu0 %v580
      %v628 = vpop.f32.mrb[0].mxu0
      %v629 = vadd.f32 %v574, %v628
      %v630 = vpop.f32.mrb[0].mxu0
      %v631 = vpop.f32.mrb[0].mxu0
      %v632 = vadd.f32 %v574, %v631
      %v633 = vpop.f32.mrb[0].mxu0
      %634 = vdwg.mxu0
      %v635 = vmax.f32 %v621, 0.0
      %v636 = vmax.f32 %v624, 0.0
      %v637 = vmax.f32 %v629, 0.0
      %v638 = vmax.f32 %v632, 0.0
      %v639 = vpack.c.bf16 %v636, %v635
      %v640 = vpack.c.bf16 %v638, %v637
      %v641 = vld [vmem:[%s7] sm:$0xf]
      %v642 = vld [vmem:[%s7 + $0x4] sm:$0xf]
      %v643 = vld [vmem:[%s8] sm:$0x1]
      %v644 = vunpack.c.l.bf16 %v643
      %v645 = vlaneseq
      %v646 = vshrl.u32 %v645, 7
      %v647 = vsub.s32 0, %v646
      %v648 = vrot.slane %v644, %v647
      %v651 = vunpack.c.l.b16 %v641
      %v652 = vunpack.c.l.b16 %v642
      %v653 = vpack.c.b16 %v652, %v651
      %v656 = vsel %vm506, %v639, 0
      %v659 = vsel %vm506, %v640, 0
      %661 = vmatprep.subr.bf16.mxu0 0
      %662 = vmatpush1.bf16.msra.mxu0 %v653
      %663 = vmatprep.subr.bf16.mxu0 0
      %664 = vmatpush1.bf16.msra.mxu0 0
      %665 = vmatprep.subr.bf16.mxu0 0
      %666 = vmatpush1.bf16.msra.mxu0 0
      %667 = vmatprep.subr.bf16.mxu0 0
      %668 = vmatpush1.bf16.msra.mxu0 0
      %669 = vmatprep.subr.bf16.mxu0 0
      %670 = vmatpush1.bf16.msra.mxu0 0
      %671 = vmatprep.subr.bf16.mxu0 0
      %672 = vmatpush1.bf16.msra.mxu0 0
      %673 = vmatprep.subr.bf16.mxu0 0
      %674 = vmatpush1.bf16.msra.mxu0 0
      %675 = vmatprep.subr.bf16.mxu0 0
      %676 = vmatpush1.bf16.msra.mxu0 0
      %677 = vmatprep.subr.bf16.mxu0 0
      %678 = vmatpush1.bf16.msra.mxu0 0
      %679 = vmatprep.subr.bf16.mxu0 0
      %680 = vmatpush1.bf16.msra.mxu0 0
      %681 = vmatprep.subr.bf16.mxu0 0
      %682 = vmatpush1.bf16.msra.mxu0 0
      %683 = vmatprep.subr.bf16.mxu0 0
      %684 = vmatpush1.bf16.msra.mxu0 0
      %685 = vmatprep.subr.bf16.mxu0 0
      %686 = vmatpush1.bf16.msra.mxu0 0
      %687 = vmatprep.subr.bf16.mxu0 0
      %688 = vmatpush1.bf16.msra.mxu0 0
      %689 = vmatprep.subr.bf16.mxu0 0
      %690 = vmatpush1.bf16.msra.mxu0 0
      %691 = vmatprep.subr.bf16.mxu0 0
      %692 = vmatpush1.bf16.msra.mxu0 0
      %693 = vmatprep.mubr.bf16.mxu0 0
      %694 = vmatmul.mubr.bf16.gmra.mrb[0].mxu0 %v656
      %v695 = vpop.f32.mrb[0].mxu0
      %v696 = vadd.f32 %v648, %v695
      %v697 = vpop.f32.mrb[0].mxu0
      %v698 = vpop.f32.mrb[0].mxu0
      %v699 = vadd.f32 %v648, %v698
      %v700 = vpop.f32.mrb[0].mxu0
      %701 = vmatprep.mubr.bf16.mxu0 0
      %702 = vmatmul.mubr.bf16.gmra.mrb[0].mxu0 %v659
      %v703 = vpop.f32.mrb[0].mxu0
      %v704 = vadd.f32 %v648, %v703
      %v705 = vpop.f32.mrb[0].mxu0
      %v706 = vpop.f32.mrb[0].mxu0
      %v707 = vadd.f32 %v648, %v706
      %v708 = vpop.f32.mrb[0].mxu0
      %709 = vdwg.mxu0
      %v710 = vxor.u32 %v696, 2147483648
      %v711 = vxor.u32 %v699, 2147483648
      %v712 = vxor.u32 %v704, 2147483648
      %v713 = vxor.u32 %v707, 2147483648
      %v714 = vmul.f32 %v710, 1.442695
      %v715 = vpow.pop %v714
      %v716 = vmul.f32 %v711, 1.442695
      %v717 = vpow.pop %v716
      %v718 = vmul.f32 %v712, 1.442695
      %v719 = vpow.pop %v718
      %v720 = vmul.f32 %v713, 1.442695
      %v721 = vpow.pop %v720
      %v722 = vadd.f32 %v715, 1.0
      %v723 = vadd.f32 %v717, 1.0
      %v724 = vadd.f32 %v719, 1.0
      %v725 = vadd.f32 %v721, 1.0
      %v726 = vrcp.pop %v722
      %v727 = vmul.f32 1.0, %v726
      %v728 = vrcp.pop %v723
      %v729 = vmul.f32 1.0, %v728
      %v730 = vrcp.pop %v724
      %v731 = vmul.f32 1.0, %v730
      %v732 = vrcp.pop %v725
      %v733 = vmul.f32 1.0, %v732
      %v734 = vpack.c.bf16 %v729, %v727
      %v735 = vpack.c.bf16 %v733, %v731
      %v738 = vunpack.c.l.b16 %v734
      %v739 = vunpack.c.h.b16 %v734
      %v740 = vunpack.c.l.b16 %v735
      %v741 = vunpack.c.h.b16 %v735
      %v742 = vpack.c.b16 %v738, %v738
      %v743 = vpack.c.b16 %v739, %v739
      %v744 = vpack.c.b16 %v740, %v740
      %v745 = vpack.c.b16 %v741, %v741
      %vm750 = vcmask 519168
      %751 = vst.msk [vmem:[%s369] sm:$0xf] %vm750, %v742
      %752 = vst.msk [vmem:[%s369 + $0x4] sm:$0xf] %vm750, %v743
      %753 = vst.msk [vmem:[%s369 + $0x8] sm:$0xf] %vm750, %v744
      %754 = vst.msk [vmem:[%s369 + $0xc] sm:$0xf] %vm750, %v745
      %755 = vst.msk [vmem:[%s375] sm:$0xff] %vm575, %v562
      %756 = vst.msk [vmem:[%s375 + $0x8] sm:$0xff] %vm575, %v563
      %757 = vst.msk [vmem:[%s375 + $0x10] sm:$0xff] %vm575, %v564
      %758 = vst.msk [vmem:[%s375 + $0x18] sm:$0xff] %vm575, %v565
      %s759 = smul.u32 4, %s22
      %p760 = scmp.lt.s32.totalorder %s759, 31
      %s761 = scalar_select %p760, %s759, 31
      %s762 = smul.addr %s761, 4
      %s763 = scalar_lea.vmem %s9, %s762
      %s764 = smul.u32 4, %s22
      %p765 = scmp.lt.s32.totalorder %s764, 31
      %s766 = scalar_select %p765, %s764, 31
      %s767 = smul.addr %s766, 8
      %s768 = scalar_lea.vmem %s10, %s767
      // Predicated region
      $region57: #{tpu_custom_call.1} parent=55 // pred_check
        %p769 = pneg %p234
      $region58: #{tpu_custom_call.1} parent=55 // pred_check_branch
        %771 = sbr.rel (%p769) target = $region60
      $region59: #{tpu_custom_call.1} parent=55 // pred_region
        %s772 = smul.u32 4, %s22
      $region60: #{tpu_custom_call.1} parent=55 // pred_fallthru
        _
      // Predicated region
      $region61: #{tpu_custom_call.1} parent=55 // pred_check
        %p773 = pneg %p260
      $region62: #{tpu_custom_call.1} parent=55 // pred_check_branch
        %775 = sbr.rel (%p773) target = $region64
      $region63: #{tpu_custom_call.1} parent=55 // pred_region
        %s776 = smul.u32 4, %s22
      $region64: #{tpu_custom_call.1} parent=55 // pred_fallthru
        _
    $region56: #{tpu_custom_call.1} parent=5 // pred_fallthru
      _
    %p777 = scmp.le.s32.totalorder 2, %s17
    // Predicated region
    $region65: #{tpu_custom_call.1} parent=5 // pred_check
      %p778 = pneg %p777
    $region66: #{tpu_custom_call.1} parent=5 // pred_check_branch
      %780 = sbr.rel (%p778) target = $region68
    $region67: #{tpu_custom_call.1} parent=5 // pred_region
      %s781 = ssub.s32 %s17, 2
      // Predicated region
      $region69: #{tpu_custom_call.1} parent=67 // pred_check
        %p782 = pneg %p240
      $region70: #{tpu_custom_call.1} parent=67 // pred_check_branch
        %784 = sbr.rel (%p782) target = $region72
      $region71: #{tpu_custom_call.1} parent=67 // pred_region
        %s785 = smul.u32 4, %s23
        %p786 = scmp.lt.s32.totalorder %s785, 31
        %s787 = scalar_select %p786, %s785, 31
        %s788 = smul.addr %s787, 4
        %s789 = scalar_lea.vmem %s9, %s788
      $region72: #{tpu_custom_call.1} parent=67 // pred_fallthru
        _
      // Predicated region
      $region73: #{tpu_custom_call.1} parent=67 // pred_check
        %p790 = pneg %p266
      $region74: #{tpu_custom_call.1} parent=67 // pred_check_branch
        %792 = sbr.rel (%p790) target = $region76
      $region75: #{tpu_custom_call.1} parent=67 // pred_region
        %s793 = smul.u32 4, %s23
        %p794 = scmp.lt.s32.totalorder %s793, 31
        %s795 = scalar_select %p794, %s793, 31
        %s796 = smul.addr %s795, 8
        %s797 = scalar_lea.vmem %s10, %s796
      $region76: #{tpu_custom_call.1} parent=67 // pred_fallthru
        _
    $region68: #{tpu_custom_call.1} parent=5 // pred_fallthru
      _
  $region6: #{tpu_custom_call.1} parent=0 // loop_footer
    %s21 = sadd.s32 1, %s17
  $region7: #{tpu_custom_call.1} parent=0 // loop_footer_branch
    %16 = sbr.rel target = $region3
  $region8: #{tpu_custom_call.1} parent=0 // loop_exit
    _

// kernel: tpu_custom_call.1
$region0: #{tpu_custom_call.1}
  #allocation0 [shape = 'u32[]', space=smem, size = 0x4, offset = 0x4, fixed_abs, tag = 'smem constant byte address 0x4 - core index']
  #allocation1 [shape = 'u32[144,128]{1,0:T(1,128)}', space=vmem, size = 0x12000, scoped, tag = 'internal scratch']
  %s0 = inlined_call_operand.vmem [shape: bf16[256,64], index: 0, kind: input, shape index: {}]
  %s1 = inlined_call_operand.vmem [shape: bf16[64,16], index: 1, kind: input, shape index: {}]
  %s2 = inlined_call_operand.vmem [shape: bf16[1,16], index: 2, kind: input, shape index: {}]
  %s3 = inlined_call_operand.vmem [shape: bf16[16,8], index: 3, kind: input, shape index: {}]
  %s4 = inlined_call_operand.vmem [shape: bf16[1,8], index: 4, kind: input, shape index: {}]
  %s5 = inlined_call_operand.vmem [shape: bf16[8,16], index: 5, kind: input, shape index: {}]
  %s6 = inlined_call_operand.vmem [shape: bf16[1,16], index: 6, kind: input, shape index: {}]
  %s7 = inlined_call_operand.vmem [shape: bf16[16,64], index: 7, kind: input, shape index: {}]
  %s8 = inlined_call_operand.vmem [shape: bf16[1,64], index: 8, kind: input, shape index: {}]
  %s9 = inlined_call_operand.vmem [shape: bf16[256,64], index: 9, kind: output, shape index: {0}]
  %s10 = inlined_call_operand.vmem [shape: f32[256,8], index: 10, kind: output, shape index: {1}]
  %11 = xla_tuple %s9, %s10
  %s12 = sld [smem:[#allocation0]]
  $region77: #{tpu_custom_call.1} parent=0
    _
  %s14 = ssub.s32 1, %s12
  %s15 = scalar_select 0, %s14, %s12
  loop: start=0, step=1, limit=10
  $region2: #{tpu_custom_call.1} parent=0 // loop_pre_header
    _
  $region3: #{tpu_custom_call.1} parent=0 // loop_header
    %s17 = sphi 0, %s21
    %p18 = scmp.ge.s32.totalorder %s17, 10
    %s27 = sphi 0, %s29
    %s30 = sphi 0, %s27
    %s31 = sphi 0, %s30
    %s47 = sphi 0, %s31
    %s51 = sphi 0, %s51
    %s53 = sphi 0, %s51
    %s54 = sphi 0, %s53
    %s68 = sphi 0, %s54
    %s72 = sphi 0, %s72
    %s74 = sphi 0, %s72
    %s75 = sphi 0, %s74
    %s89 = sphi 0, %s75
    %s93 = sphi 0, %s93
    %s95 = sphi 0, %s93
    %s96 = sphi 0, %s95
    %s110 = sphi 0, %s96
    %s114 = sphi 0, %s114
    %s116 = sphi 0, %s114
    %s117 = sphi 0, %s116
    %s131 = sphi 0, %s117
    %s135 = sphi 0, %s135
    %s137 = sphi 0, %s135
    %s138 = sphi 0, %s137
    %s152 = sphi 0, %s138
    %s156 = sphi 0, %s156
    %s158 = sphi 0, %s156
    %s159 = sphi 0, %s158
    %s173 = sphi 0, %s159
    %s177 = sphi 0, %s177
    %s179 = sphi 0, %s177
    %s180 = sphi 0, %s179
    %s194 = sphi 0, %s180
    %s198 = sphi 0, %s198
    %s200 = sphi 0, %s198
    %s201 = sphi 0, %s200
    %s215 = sphi 0, %s201
    %s221 = sphi 0, %s223
    %s224 = sphi 0, %s221
    %s225 = sphi 0, %s224
    %s241 = sphi 0, %s225
    %s247 = sphi 0, %s249
    %s250 = sphi 0, %s247
    %s251 = sphi 0, %s250
    %s267 = sphi 0, %s251
  $region4: #{tpu_custom_call.1} parent=0 // loop_header_branch
    %20 = sbr.rel (%p18) target = $region8
  $region5: #{tpu_custom_call.1} parent=0 // loop_body
    %s22 = ssub.s32 %s17, 1
    %s23 = ssub.s32 %s17, 2
    %s24 = sadd.s32 %s17, 1
    %s25 = ssub.s32 %s17, %s24
    %p26 = scmp.eq.s32.totalorder %s25, 0
    %s28 = sadd.s32 %s27, 1
    %s29 = scalar_select %p26, %s27, %s28
    %p32 = pneg %p26
    %p33 = scmp.eq.s32.totalorder %s17, 7
    %p34 = por %p32, %p33
    %p35 = scmp.ne.s32.totalorder %s27, %s30
    %p36 = scmp.eq.s32.totalorder %s17, 0
    %p37 = por %p35, %p36
    %p38 = scmp.ne.s32.totalorder %s27, %s30
    %p39 = scmp.eq.s32.totalorder %s22, 7
    %p40 = por %p38, %p39
    %p41 = scmp.ne.s32.totalorder %s30, %s31
    %p42 = scmp.eq.s32.totalorder %s22, 0
    %p43 = por %p41, %p42
    %p44 = scmp.ne.s32.totalorder %s30, %s31
    %p45 = scmp.eq.s32.totalorder %s23, 7
    %p46 = por %p44, %p45
    %p48 = scmp.ne.s32.totalorder %s31, %s47
    %p49 = scmp.eq.s32.totalorder %s23, 0
    %p50 = por %p48, %p49
    %s52 = sadd.s32 %s51, 1
    %p55 = scmp.eq.s32.totalorder %s17, 7
    %p56 = scmp.ne.s32.totalorder %s51, %s53
    %p57 = scmp.eq.s32.totalorder %s17, 0
    %p58 = por %p56, %p57
    %p59 = scmp.ne.s32.totalorder %s51, %s53
    %p60 = scmp.eq.s32.totalorder %s22, 7
    %p61 = por %p59, %p60
    %p62 = scmp.ne.s32.totalorder %s53, %s54
    %p63 = scmp.eq.s32.totalorder %s22, 0
    %p64 = por %p62, %p63
    %p65 = scmp.ne.s32.totalorder %s53, %s54
    %p66 = scmp.eq.s32.totalorder %s23, 7
    %p67 = por %p65, %p66
    %p69 = scmp.ne.s32.totalorder %s54, %s68
    %p70 = scmp.eq.s32.totalorder %s23, 0
    %p71 = por %p69, %p70
    %s73 = sadd.s32 %s72, 1
    %p76 = scmp.eq.s32.totalorder %s17, 7
    %p77 = scmp.ne.s32.totalorder %s72, %s74
    %p78 = scmp.eq.s32.totalorder %s17, 0
    %p79 = por %p77, %p78
    %p80 = scmp.ne.s32.totalorder %s72, %s74
    %p81 = scmp.eq.s32.totalorder %s22, 7
    %p82 = por %p80, %p81
    %p83 = scmp.ne.s32.totalorder %s74, %s75
    %p84 = scmp.eq.s32.totalorder %s22, 0
    %p85 = por %p83, %p84
    %p86 = scmp.ne.s32.totalorder %s74, %s75
    %p87 = scmp.eq.s32.totalorder %s23, 7
    %p88 = por %p86, %p87
    %p90 = scmp.ne.s32.totalorder %s75, %s89
    %p91 = scmp.eq.s32.totalorder %s23, 0
    %p92 = por %p90, %p91
    %s94 = sadd.s32 %s93, 1
    %p97 = scmp.eq.s32.totalorder %s17, 7
    %p98 = scmp.ne.s32.totalorder %s93, %s95
    %p99 = scmp.eq.s32.totalorder %s17, 0
    %p100 = por %p98, %p99
    %p101 = scmp.ne.s32.totalorder %s93, %s95
    %p102 = scmp.eq.s32.totalorder %s22, 7
    %p103 = por %p101, %p102
    %p104 = scmp.ne.s32.totalorder %s95, %s96
    %p105 = scmp.eq.s32.totalorder %s22, 0
    %p106 = por %p104, %p105
    %p107 = scmp.ne.s32.totalorder %s95, %s96
    %p108 = scmp.eq.s32.totalorder %s23, 7
    %p109 = por %p107, %p108
    %p111 = scmp.ne.s32.totalorder %s96, %s110
    %p112 = scmp.eq.s32.totalorder %s23, 0
    %p113 = por %p111, %p112
    %s115 = sadd.s32 %s114, 1
    %p118 = scmp.eq.s32.totalorder %s17, 7
    %p119 = scmp.ne.s32.totalorder %s114, %s116
    %p120 = scmp.eq.s32.totalorder %s17, 0
    %p121 = por %p119, %p120
    %p122 = scmp.ne.s32.totalorder %s114, %s116
    %p123 = scmp.eq.s32.totalorder %s22, 7
    %p124 = por %p122, %p123
    %p125 = scmp.ne.s32.totalorder %s116, %s117
    %p126 = scmp.eq.s32.totalorder %s22, 0
    %p127 = por %p125, %p126
    %p128 = scmp.ne.s32.totalorder %s116, %s117
    %p129 = scmp.eq.s32.totalorder %s23, 7
    %p130 = por %p128, %p129
    %p132 = scmp.ne.s32.totalorder %s117, %s131
    %p133 = scmp.eq.s32.totalorder %s23, 0
    %p134 = por %p132, %p133
    %s136 = sadd.s32 %s135, 1
    %p139 = scmp.eq.s32.totalorder %s17, 7
    %p140 = scmp.ne.s32.totalorder %s135, %s137
    %p141 = scmp.eq.s32.totalorder %s17, 0
    %p142 = por %p140, %p141
    %p143 = scmp.ne.s32.totalorder %s135, %s137
    %p144 = scmp.eq.s32.totalorder %s22, 7
    %p145 = por %p143, %p144
    %p146 = scmp.ne.s32.totalorder %s137, %s138
    %p147 = scmp.eq.s32.totalorder %s22, 0
    %p148 = por %p146, %p147
    %p149 = scmp.ne.s32.totalorder %s137, %s138
    %p150 = scmp.eq.s32.totalorder %s23, 7
    %p151 = por %p149, %p150
    %p153 = scmp.ne.s32.totalorder %s138, %s152
    %p154 = scmp.eq.s32.totalorder %s23, 0
    %p155 = por %p153, %p154
    %s157 = sadd.s32 %s156, 1
    %p160 = scmp.eq.s32.totalorder %s17, 7
    %p161 = scmp.ne.s32.totalorder %s156, %s158
    %p162 = scmp.eq.s32.totalorder %s17, 0
    %p163 = por %p161, %p162
    %p164 = scmp.ne.s32.totalorder %s156, %s158
    %p165 = scmp.eq.s32.totalorder %s22, 7
    %p166 = por %p164, %p165
    %p167 = scmp.ne.s32.totalorder %s158, %s159
    %p168 = scmp.eq.s32.totalorder %s22, 0
    %p169 = por %p167, %p168
    %p170 = scmp.ne.s32.totalorder %s158, %s159
    %p171 = scmp.eq.s32.totalorder %s23, 7
    %p172 = por %p170, %p171
    %p174 = scmp.ne.s32.totalorder %s159, %s173
    %p175 = scmp.eq.s32.totalorder %s23, 0
    %p176 = por %p174, %p175
    %s178 = sadd.s32 %s177, 1
    %p181 = scmp.eq.s32.totalorder %s17, 7
    %p182 = scmp.ne.s32.totalorder %s177, %s179
    %p183 = scmp.eq.s32.totalorder %s17, 0
    %p184 = por %p182, %p183
    %p185 = scmp.ne.s32.totalorder %s177, %s179
    %p186 = scmp.eq.s32.totalorder %s22, 7
    %p187 = por %p185, %p186
    %p188 = scmp.ne.s32.totalorder %s179, %s180
    %p189 = scmp.eq.s32.totalorder %s22, 0
    %p190 = por %p188, %p189
    %p191 = scmp.ne.s32.totalorder %s179, %s180
    %p192 = scmp.eq.s32.totalorder %s23, 7
    %p193 = por %p191, %p192
    %p195 = scmp.ne.s32.totalorder %s180, %s194
    %p196 = scmp.eq.s32.totalorder %s23, 0
    %p197 = por %p195, %p196
    %s199 = sadd.s32 %s198, 1
    %p202 = scmp.eq.s32.totalorder %s17, 7
    %p203 = scmp.ne.s32.totalorder %s198, %s200
    %p204 = scmp.eq.s32.totalorder %s17, 0
    %p205 = por %p203, %p204
    %p206 = scmp.ne.s32.totalorder %s198, %s200
    %p207 = scmp.eq.s32.totalorder %s22, 7
    %p208 = por %p206, %p207
    %p209 = scmp.ne.s32.totalorder %s200, %s201
    %p210 = scmp.eq.s32.totalorder %s22, 0
    %p211 = por %p209, %p210
    %p212 = scmp.ne.s32.totalorder %s200, %s201
    %p213 = scmp.eq.s32.totalorder %s23, 7
    %p214 = por %p212, %p213
    %p216 = scmp.ne.s32.totalorder %s201, %s215
    %p217 = scmp.eq.s32.totalorder %s23, 0
    %p218 = por %p216, %p217
    %s219 = ssub.s32 %s17, %s24
    %p220 = scmp.eq.s32.totalorder %s219, 0
    %s222 = sadd.s32 %s221, 1
    %s223 = scalar_select %p220, %s221, %s222
    %p226 = pneg %p220
    %p227 = scmp.eq.s32.totalorder %s17, 7
    %p228 = por %p226, %p227
    %p229 = scmp.ne.s32.totalorder %s221, %s224
    %p230 = scmp.eq.s32.totalorder %s17, 0
    %p231 = por %p229, %p230
    %p232 = scmp.ne.s32.totalorder %s221, %s224
    %p233 = scmp.eq.s32.totalorder %s22, 7
    %p234 = por %p232, %p233
    %p235 = scmp.ne.s32.totalorder %s224, %s225
    %p236 = scmp.eq.s32.totalorder %s22, 0
    %p237 = por %p235, %p236
    %p238 = scmp.ne.s32.totalorder %s224, %s225
    %p239 = scmp.eq.s32.totalorder %s23, 7
    %p240 = por %p238, %p239
    %p242 = scmp.ne.s32.totalorder %s225, %s241
    %p243 = scmp.eq.s32.totalorder %s23, 0
    %p244 = por %p242, %p243
    %s245 = ssub.s32 %s17, %s24
    %p246 = scmp.eq.s32.totalorder %s245, 0
    %s248 = sadd.s32 %s247, 1
    %s249 = scalar_select %p246, %s247, %s248
    %p252 = pneg %p246
    %p253 = scmp.eq.s32.totalorder %s17, 7
    %p254 = por %p252, %p253
    %p255 = scmp.ne.s32.totalorder %s247, %s250
    %p256 = scmp.eq.s32.totalorder %s17, 0
    %p257 = por %p255, %p256
    %p258 = scmp.ne.s32.totalorder %s247, %s250
    %p259 = scmp.eq.s32.totalorder %s22, 7
    %p260 = por %p258, %p259
    %p261 = scmp.ne.s32.totalorder %s250, %s251
    %p262 = scmp.eq.s32.totalorder %s22, 0
    %p263 = por %p261, %p262
    %p264 = scmp.ne.s32.totalorder %s250, %s251
    %p265 = scmp.eq.s32.totalorder %s23, 7
    %p266 = por %p264, %p265
    %p268 = scmp.ne.s32.totalorder %s251, %s267
    %p269 = scmp.eq.s32.totalorder %s23, 0
    %p270 = por %p268, %p269
    %p271 = scmp.le.s32.totalorder 1, %s17
    %p272 = scmp.lt.s32.totalorder %s17, 9
    %p273 = pnand %p271, %p272
    %p274 = pneg %p273
    // Predicated region
    $region9: #{tpu_custom_call.1} parent=5 // pred_check
      _
    $region10: #{tpu_custom_call.1} parent=5 // pred_check_branch
      %276 = sbr.rel (%p273) target = $region12
    $region11: #{tpu_custom_call.1} parent=5 // pred_region
      %s277 = ssub.s32 %s17, 1
      // Predicated region
      $region13: #{tpu_custom_call.1} parent=11 // pred_check
        %p278 = pneg %p64
      $region14: #{tpu_custom_call.1} parent=11 // pred_check_branch
        %280 = sbr.rel (%p278) target = $region16
      $region15: #{tpu_custom_call.1} parent=11 // pred_region
        _
      $region16: #{tpu_custom_call.1} parent=11 // pred_fallthru
        _
      // Predicated region
      $region17: #{tpu_custom_call.1} parent=11 // pred_check
        %p281 = pneg %p85
      $region18: #{tpu_custom_call.1} parent=11 // pred_check_branch
        %283 = sbr.rel (%p281) target = $region20
      $region19: #{tpu_custom_call.1} parent=11 // pred_region
        _
      $region20: #{tpu_custom_call.1} parent=11 // pred_fallthru
        _
      // Predicated region
      $region21: #{tpu_custom_call.1} parent=11 // pred_check
        %p284 = pneg %p106
      $region22: #{tpu_custom_call.1} parent=11 // pred_check_branch
        %286 = sbr.rel (%p284) target = $region24
      $region23: #{tpu_custom_call.1} parent=11 // pred_region
        _
      $region24: #{tpu_custom_call.1} parent=11 // pred_fallthru
        _
      // Predicated region
      $region25: #{tpu_custom_call.1} parent=11 // pred_check
        %p287 = pneg %p127
      $region26: #{tpu_custom_call.1} parent=11 // pred_check_branch
        %289 = sbr.rel (%p287) target = $region28
      $region27: #{tpu_custom_call.1} parent=11 // pred_region
        _
      $region28: #{tpu_custom_call.1} parent=11 // pred_fallthru
        _
      // Predicated region
      $region29: #{tpu_custom_call.1} parent=11 // pred_check
        %p290 = pneg %p148
      $region30: #{tpu_custom_call.1} parent=11 // pred_check_branch
        %292 = sbr.rel (%p290) target = $region32
      $region31: #{tpu_custom_call.1} parent=11 // pred_region
        _
      $region32: #{tpu_custom_call.1} parent=11 // pred_fallthru
        _
      // Predicated region
      $region33: #{tpu_custom_call.1} parent=11 // pred_check
        %p293 = pneg %p169
      $region34: #{tpu_custom_call.1} parent=11 // pred_check_branch
        %295 = sbr.rel (%p293) target = $region36
      $region35: #{tpu_custom_call.1} parent=11 // pred_region
        _
      $region36: #{tpu_custom_call.1} parent=11 // pred_fallthru
        _
      // Predicated region
      $region37: #{tpu_custom_call.1} parent=11 // pred_check
        %p296 = pneg %p190
      $region38: #{tpu_custom_call.1} parent=11 // pred_check_branch
        %298 = sbr.rel (%p296) target = $region40
      $region39: #{tpu_custom_call.1} parent=11 // pred_region
        _
      $region40: #{tpu_custom_call.1} parent=11 // pred_fallthru
        _
      // Predicated region
      $region41: #{tpu_custom_call.1} parent=11 // pred_check
        %p299 = pneg %p211
      $region42: #{tpu_custom_call.1} parent=11 // pred_check_branch
        %301 = sbr.rel (%p299) target = $region44
      $region43: #{tpu_custom_call.1} parent=11 // pred_region
        _
      $region44: #{tpu_custom_call.1} parent=11 // pred_fallthru
        _
    $region12: #{tpu_custom_call.1} parent=5 // pred_fallthru
      _
    %p302 = scmp.lt.s32.totalorder %s17, 8
    // Predicated region
    $region45: #{tpu_custom_call.1} parent=5 // pred_check
      %p303 = pneg %p302
    $region46: #{tpu_custom_call.1} parent=5 // pred_check_branch
      %305 = sbr.rel (%p303) target = $region48
    $region47: #{tpu_custom_call.1} parent=5 // pred_region
      // Predicated region
      $region49: #{tpu_custom_call.1} parent=47 // pred_check
        %p306 = pneg %p37
      $region50: #{tpu_custom_call.1} parent=47 // pred_check_branch
        %308 = sbr.rel (%p306) target = $region52
      $region51: #{tpu_custom_call.1} parent=47 // pred_region
        %s309 = smul.u32 4, %s17
        %p310 = scmp.lt.s32.totalorder %s309, 31
        %s311 = scalar_select %p310, %s309, 31
        %s312 = smul.addr %s311, 4
        %s313 = scalar_lea.vmem %s0, %s312
        %s314 = smul.u32 4, %s17
      $region52: #{tpu_custom_call.1} parent=47 // pred_fallthru
        _
    $region48: #{tpu_custom_call.1} parent=5 // pred_fallthru
      _
    %p315 = scmp.le.s32.totalorder 1, %s17
    %p316 = scmp.lt.s32.totalorder %s17, 9
    %p317 = pnand %p315, %p316
    %p318 = pneg %p317
    // Predicated region
    $region53: #{tpu_custom_call.1} parent=5 // pred_check
      _
    $region54: #{tpu_custom_call.1} parent=5 // pred_check_branch
      %320 = sbr.rel (%p317) target = $region56
    $region55: #{tpu_custom_call.1} parent=5 // pred_region
      %s321 = ssub.s32 %s17, 1
      %s322 = smul.u32 4, %s22
      %p323 = scmp.lt.s32.totalorder %s322, 31
      %s324 = scalar_select %p323, %s322, 31
      %s325 = smul.addr %s324, 4
      %s326 = scalar_lea.vmem %s0, %s325
      %p327 = pneg %p43
      %p328 = pneg %p40
      %p329 = pneg %p64
      %p330 = pneg %p61
      %p331 = pneg %p85
      %p332 = pneg %p82
      %p333 = pneg %p106
      %p334 = pneg %p103
      %p335 = pneg %p127
      %p336 = pneg %p124
      %p337 = pneg %p148
      %p338 = pneg %p145
      %p339 = pneg %p169
      %p340 = pneg %p166
      %p341 = pneg %p190
      %p342 = pneg %p187
      %p343 = pneg %p211
      %p344 = pneg %p208
      %p345 = pneg %p237
      %p346 = pneg %p234
      %s347 = smul.u32 4, %s22
      %p348 = scmp.lt.s32.totalorder %s347, 31
      %s349 = scalar_select %p348, %s347, 31
      %s350 = smul.addr %s349, 4
      %s351 = scalar_lea.vmem %s9, %s350
      %p352 = pneg %p263
      %p353 = pneg %p260
      %s354 = smul.u32 4, %s22
      %p355 = scmp.lt.s32.totalorder %s354, 31
      %s356 = scalar_select %p355, %s354, 31
      %s357 = smul.addr %s356, 8
      %s358 = scalar_lea.vmem %s10, %s357
      %s359 = smul.u32 4, %s22
      %p360 = scmp.lt.s32.totalorder %s359, 31
      %s361 = scalar_select %p360, %s359, 31
      %s362 = smul.addr %s361, 4
      %s363 = scalar_lea.vmem %s0, %s362
      %s364 = smul.u32 4, %s22
      %s365 = smul.u32 4, %s22
      %p366 = scmp.lt.s32.totalorder %s365, 31
      %s367 = scalar_select %p366, %s365, 31
      %s368 = smul.addr %s367, 4
      %s369 = scalar_lea.vmem %s9, %s368
      %s370 = smul.u32 4, %s22
      %s371 = smul.u32 4, %s22
      %p372 = scmp.lt.s32.totalorder %s371, 31
      %s373 = scalar_select %p372, %s371, 31
      %s374 = smul.addr %s373, 8
      %s375 = scalar_lea.vmem %s10, %s374
      %s376 = smul.u32 4, %s22
      %v378 = vld [vmem:[%s363] sm:$0xf]
      %v379 = vld [vmem:[%s363 + $0x4] sm:$0xf]
      %v380 = vld [vmem:[%s363 + $0x8] sm:$0xf]
      %v381 = vld [vmem:[%s363 + $0xc] sm:$0xf]
      %v382 = vld [vmem:[%s1] sm:$0xf]
      %v383 = vld [vmem:[%s1 + $0x4] sm:$0xf]
      %v384 = vld [vmem:[%s1 + $0x8] sm:$0xf]
      %v385 = vld [vmem:[%s1 + $0xc] sm:$0xf]
      %v386 = vld [vmem:[%s1 + $0x10] sm:$0xf]
      %v387 = vld [vmem:[%s1 + $0x14] sm:$0xf]
      %v388 = vld [vmem:[%s1 + $0x18] sm:$0xf]
      %v389 = vld [vmem:[%s1 + $0x1c] sm:$0xf]
      %v390 = vld [vmem:[%s2] sm:$0x1]
      %v391 = vunpack.c.l.bf16 %v390
      %v392 = vlaneseq
      %v393 = vshrl.u32 %v392, 7
      %v394 = vsub.s32 0, %v393
      %v395 = vrot.slane %v391, %v394
      %v400 = vunpack.c.l.b16 %v378
      %v401 = vunpack.c.l.b16 %v379
      %v402 = vunpack.c.l.b16 %v380
      %v403 = vunpack.c.l.b16 %v381
      %v404 = vpack.c.b16 %v401, %v400
      %v405 = vpack.c.b16 %v403, %v402
      %v414 = vunpack.c.l.b16 %v382
      %v415 = vunpack.c.l.b16 %v383
      %v416 = vunpack.c.l.b16 %v384
      %v417 = vunpack.c.l.b16 %v385
      %v418 = vunpack.c.l.b16 %v386
      %v419 = vunpack.c.l.b16 %v387
      %v420 = vunpack.c.l.b16 %v388
      %v421 = vunpack.c.l.b16 %v389
      %v422 = vpack.c.b16 %v415, %v414
      %v423 = vpack.c.b16 %v417, %v416
      %v424 = vpack.c.b16 %v419, %v418
      %v425 = vpack.c.b16 %v421, %v420
      %vm430 = vcmask 523264
      %v432 = vsel %vm430, %v404, 0
      %v435 = vsel %vm430, %v405, 0
      %437 = vmatprep.subr.bf16.mxu0 0
      %438 = vmatpush1.bf16.msra.mxu0 %v422
      %439 = vmatprep.subr.bf16.mxu0 0
      %440 = vmatpush1.bf16.msra.mxu0 %v423
      %441 = vmatprep.subr.bf16.mxu0 0
      %442 = vmatpush1.bf16.msra.mxu0 %v424
      %443 = vmatprep.subr.bf16.mxu0 0
      %444 = vmatpush1.bf16.msra.mxu0 %v425
      %445 = vmatprep.subr.bf16.mxu0 0
      %446 = vmatpush1.bf16.msra.mxu0 0
      %447 = vmatprep.subr.bf16.mxu0 0
      %448 = vmatpush1.bf16.msra.mxu0 0
      %449 = vmatprep.subr.bf16.mxu0 0
      %450 = vmatpush1.bf16.msra.mxu0 0
      %451 = vmatprep.subr.bf16.mxu0 0
      %452 = vmatpush1.bf16.msra.mxu0 0
      %453 = vmatprep.subr.bf16.mxu0 0
      %454 = vmatpush1.bf16.msra.mxu0 0
      %455 = vmatprep.subr.bf16.mxu0 0
      %456 = vmatpush1.bf16.msra.mxu0 0
      %457 = vmatprep.subr.bf16.mxu0 0
      %458 = vmatpush1.bf16.msra.mxu0 0
      %459 = vmatprep.subr.bf16.mxu0 0
      %460 = vmatpush1.bf16.msra.mxu0 0
      %461 = vmatprep.subr.bf16.mxu0 0
      %462 = vmatpush1.bf16.msra.mxu0 0
      %463 = vmatprep.subr.bf16.mxu0 0
      %464 = vmatpush1.bf16.msra.mxu0 0
      %465 = vmatprep.subr.bf16.mxu0 0
      %466 = vmatpush1.bf16.msra.mxu0 0
      %467 = vmatprep.subr.bf16.mxu0 0
      %468 = vmatpush1.bf16.msra.mxu0 0
      %469 = vmatprep.mubr.bf16.mxu0 0
      %470 = vmatmul.mubr.bf16.gmra.mrb[0].mxu0 %v432
      %v471 = vpop.f32.mrb[0].mxu0
      %v472 = vadd.f32 %v395, %v471
      %v473 = vpop.f32.mrb[0].mxu0
      %v474 = vpop.f32.mrb[0].mxu0
      %v475 = vadd.f32 %v395, %v474
      %v476 = vpop.f32.mrb[0].mxu0
      %477 = vmatprep.mubr.bf16.mxu0 0
      %478 = vmatmul.mubr.bf16.gmra.mrb[0].mxu0 %v435
      %v479 = vpop.f32.mrb[0].mxu0
      %v480 = vadd.f32 %v395, %v479
      %v481 = vpop.f32.mrb[0].mxu0
      %v482 = vpop.f32.mrb[0].mxu0
      %v483 = vadd.f32 %v395, %v482
      %v484 = vpop.f32.mrb[0].mxu0
      %485 = vdwg.mxu0
      %v486 = vmax.f32 %v472, 0.0
      %v487 = vmax.f32 %v475, 0.0
      %v488 = vmax.f32 %v480, 0.0
      %v489 = vmax.f32 %v483, 0.0
      %v490 = vpack.c.bf16 %v487, %v486
      %v491 = vpack.c.bf16 %v489, %v488
      %v492 = vld [vmem:[%s3] sm:$0xf]
      %v493 = vld [vmem:[%s3 + $0x4] sm:$0xf]
      %v494 = vld [vmem:[%s4] sm:$0x1]
      %v495 = vunpack.c.l.bf16 %v494
      %v496 = vlaneseq
      %v497 = vshrl.u32 %v496, 7
      %v498 = vsub.s32 0, %v497
      %v499 = vrot.slane %v495, %v498
      %v502 = vunpack.c.l.b16 %v492
      %v503 = vunpack.c.l.b16 %v493
      %v504 = vpack.c.b16 %v503, %v502
      %vm506 = vcmask 130048
      %v508 = vsel %vm506, %v490, 0
      %v511 = vsel %vm506, %v491, 0
      %513 = vmatprep.subr.bf16.mxu0 0
      %514 = vmatpush1.bf16.msra.mxu0 %v504
      %515 = vmatprep.subr.bf16.mxu0 0
      %516 = vmatpush1.bf16.msra.mxu0 0
      %517 = vmatprep.subr.bf16.mxu0 0
      %518 = vmatpush1.bf16.msra.mxu0 0
      %519 = vmatprep.subr.bf16.mxu0 0
      %520 = vmatpush1.bf16.msra.mxu0 0
      %521 = vmatprep.subr.bf16.mxu0 0
      %522 = vmatpush1.bf16.msra.mxu0 0
      %523 = vmatprep.subr.bf16.mxu0 0
      %524 = vmatpush1.bf16.msra.mxu0 0
      %525 = vmatprep.subr.bf16.mxu0 0
      %526 = vmatpush1.bf16.msra.mxu0 0
      %527 = vmatprep.subr.bf16.mxu0 0
      %528 = vmatpush1.bf16.msra.mxu0 0
      %529 = vmatprep.subr.bf16.mxu0 0
      %530 = vmatpush1.bf16.msra.mxu0 0
      %531 = vmatprep.subr.bf16.mxu0 0
      %532 = vmatpush1.bf16.msra.mxu0 0
      %533 = vmatprep.subr.bf16.mxu0 0
      %534 = vmatpush1.bf16.msra.mxu0 0
      %535 = vmatprep.subr.bf16.mxu0 0
      %536 = vmatpush1.bf16.msra.mxu0 0
      %537 = vmatprep.subr.bf16.mxu0 0
      %538 = vmatpush1.bf16.msra.mxu0 0
      %539 = vmatprep.subr.bf16.mxu0 0
      %540 = vmatpush1.bf16.msra.mxu0 0
      %541 = vmatprep.subr.bf16.mxu0 0
      %542 = vmatpush1.bf16.msra.mxu0 0
      %543 = vmatprep.subr.bf16.mxu0 0
      %544 = vmatpush1.bf16.msra.mxu0 0
      %545 = vmatprep.mubr.bf16.mxu0 0
      %546 = vmatmul.mubr.bf16.gmra.mrb[0].mxu0 %v508
      %v547 = vpop.f32.mrb[0].mxu0
      %v548 = vadd.f32 %v499, %v547
      %v549 = vpop.f32.mrb[0].mxu0
      %v550 = vpop.f32.mrb[0].mxu0
      %v551 = vadd.f32 %v499, %v550
      %v552 = vpop.f32.mrb[0].mxu0
      %553 = vmatprep.mubr.bf16.mxu0 0
      %554 = vmatmul.mubr.bf16.gmra.mrb[0].mxu0 %v511
      %v555 = vpop.f32.mrb[0].mxu0
      %v556 = vadd.f32 %v499, %v555
      %v557 = vpop.f32.mrb[0].mxu0
      %v558 = vpop.f32.mrb[0].mxu0
      %v559 = vadd.f32 %v499, %v558
      %v560 = vpop.f32.mrb[0].mxu0
      %561 = vdwg.mxu0
      %v562 = vmax.f32 %v548, 0.0
      %v563 = vmax.f32 %v551, 0.0
      %v564 = vmax.f32 %v556, 0.0
      %v565 = vmax.f32 %v559, 0.0
      %v566 = vpack.c.bf16 %v563, %v562
      %v567 = vpack.c.bf16 %v565, %v564
      %v568 = vld [vmem:[%s5] sm:$0xf]
      %v569 = vld [vmem:[%s6] sm:$0x1]
      %v570 = vunpack.c.l.bf16 %v569
      %v571 = vlaneseq
      %v572 = vshrl.u32 %v571, 7
      %v573 = vsub.s32 0, %v572
      %v574 = vrot.slane %v570, %v573
      %vm575 = vcmask 64512
      %v577 = vsel %vm575, %v566, 0
      %v580 = vsel %vm575, %v567, 0
      %vm582 = vcmask 1043456
      %v584 = vsel %vm582, %v568, 0
      %586 = vmatprep.subr.bf16.mxu0 0
      %587 = vmatpush1.bf16.msra.mxu0 %v584
      %588 = vmatprep.subr.bf16.mxu0 0
      %589 = vmatpush1.bf16.msra.mxu0 0
      %590 = vmatprep.subr.bf16.mxu0 0
      %591 = vmatpush1.bf16.msra.mxu0 0
      %592 = vmatprep.subr.bf16.mxu0 0
      %593 = vmatpush1.bf16.msra.mxu0 0
      %594 = vmatprep.subr.bf16.mxu0 0
      %595 = vmatpush1.bf16.msra.mxu0 0
      %596 = vmatprep.subr.bf16.mxu0 0
      %597 = vmatpush1.bf16.msra.mxu0 0
      %598 = vmatprep.subr.bf16.mxu0 0
      %599 = vmatpush1.bf16.msra.mxu0 0
      %600 = vmatprep.subr.bf16.mxu0 0
      %601 = vmatpush1.bf16.msra.mxu0 0
      %602 = vmatprep.subr.bf16.mxu0 0
      %603 = vmatpush1.bf16.msra.mxu0 0
      %604 = vmatprep.subr.bf16.mxu0 0
      %605 = vmatpush1.bf16.msra.mxu0 0
      %606 = vmatprep.subr.bf16.mxu0 0
      %607 = vmatpush1.bf16.msra.mxu0 0
      %608 = vmatprep.subr.bf16.mxu0 0
      %609 = vmatpush1.bf16.msra.mxu0 0
      %610 = vmatprep.subr.bf16.mxu0 0
      %611 = vmatpush1.bf16.msra.mxu0 0
      %612 = vmatprep.subr.bf16.mxu0 0
      %613 = vmatpush1.bf16.msra.mxu0 0
      %614 = vmatprep.subr.bf16.mxu0 0
      %615 = vmatpush1.bf16.msra.mxu0 0
      %616 = vmatprep.subr.bf16.mxu0 0
      %617 = vmatpush1.bf16.msra.mxu0 0
      %618 = vmatprep.mubr.bf16.mxu0 0
      %619 = vmatmul.mubr.bf16.gmra.mrb[0].mxu0 %v577
      %v620 = vpop.f32.mrb[0].mxu0
      %v621 = vadd.f32 %v574, %v620
      %v622 = vpop.f32.mrb[0].mxu0
      %v623 = vpop.f32.mrb[0].mxu0
      %v624 = vadd.f32 %v574, %v623
      %v625 = vpop.f32.mrb[0].mxu0
      %626 = vmatprep.mubr.bf16.mxu0 0
      %627 = vmatmul.mubr.bf16.gmra.mrb[0].mxu0 %v580
      %v628 = vpop.f32.mrb[0].mxu0
      %v629 = vadd.f32 %v574, %v628
      %v630 = vpop.f32.mrb[0].mxu0
      %v631 = vpop.f32.mrb[0].mxu0
      %v632 = vadd.f32 %v574, %v631
      %v633 = vpop.f32.mrb[0].mxu0
      %634 = vdwg.mxu0
      %v635 = vmax.f32 %v621, 0.0
      %v636 = vmax.f32 %v624, 0.0
      %v637 = vmax.f32 %v629, 0.0
      %v638 = vmax.f32 %v632, 0.0
      %v639 = vpack.c.bf16 %v636, %v635
      %v640 = vpack.c.bf16 %v638, %v637
      %v641 = vld [vmem:[%s7] sm:$0xf]
      %v642 = vld [vmem:[%s7 + $0x4] sm:$0xf]
      %v643 = vld [vmem:[%s8] sm:$0x1]
      %v644 = vunpack.c.l.bf16 %v643
      %v645 = vlaneseq
      %v646 = vshrl.u32 %v645, 7
      %v647 = vsub.s32 0, %v646
      %v648 = vrot.slane %v644, %v647
      %v651 = vunpack.c.l.b16 %v641
      %v652 = vunpack.c.l.b16 %v642
      %v653 = vpack.c.b16 %v652, %v651
      %v656 = vsel %vm506, %v639, 0
      %v659 = vsel %vm506, %v640, 0
      %661 = vmatprep.subr.bf16.mxu0 0
      %662 = vmatpush1.bf16.msra.mxu0 %v653
      %663 = vmatprep.subr.bf16.mxu0 0
      %664 = vmatpush1.bf16.msra.mxu0 0
      %665 = vmatprep.subr.bf16.mxu0 0
      %666 = vmatpush1.bf16.msra.mxu0 0
      %667 = vmatprep.subr.bf16.mxu0 0
      %668 = vmatpush1.bf16.msra.mxu0 0
      %669 = vmatprep.subr.bf16.mxu0 0
      %670 = vmatpush1.bf16.msra.mxu0 0
      %671 = vmatprep.subr.bf16.mxu0 0
      %672 = vmatpush1.bf16.msra.mxu0 0
      %673 = vmatprep.subr.bf16.mxu0 0
      %674 = vmatpush1.bf16.msra.mxu0 0
      %675 = vmatprep.subr.bf16.mxu0 0
      %676 = vmatpush1.bf16.msra.mxu0 0
      %677 = vmatprep.subr.bf16.mxu0 0
      %678 = vmatpush1.bf16.msra.mxu0 0
      %679 = vmatprep.subr.bf16.mxu0 0
      %680 = vmatpush1.bf16.msra.mxu0 0
      %681 = vmatprep.subr.bf16.mxu0 0
      %682 = vmatpush1.bf16.msra.mxu0 0
      %683 = vmatprep.subr.bf16.mxu0 0
      %684 = vmatpush1.bf16.msra.mxu0 0
      %685 = vmatprep.subr.bf16.mxu0 0
      %686 = vmatpush1.bf16.msra.mxu0 0
      %687 = vmatprep.subr.bf16.mxu0 0
      %688 = vmatpush1.bf16.msra.mxu0 0
      %689 = vmatprep.subr.bf16.mxu0 0
      %690 = vmatpush1.bf16.msra.mxu0 0
      %691 = vmatprep.subr.bf16.mxu0 0
      %692 = vmatpush1.bf16.msra.mxu0 0
      %693 = vmatprep.mubr.bf16.mxu0 0
      %694 = vmatmul.mubr.bf16.gmra.mrb[0].mxu0 %v656
      %v695 = vpop.f32.mrb[0].mxu0
      %v696 = vadd.f32 %v648, %v695
      %v697 = vpop.f32.mrb[0].mxu0
      %v698 = vpop.f32.mrb[0].mxu0
      %v699 = vadd.f32 %v648, %v698
      %v700 = vpop.f32.mrb[0].mxu0
      %701 = vmatprep.mubr.bf16.mxu0 0
      %702 = vmatmul.mubr.bf16.gmra.mrb[0].mxu0 %v659
      %v703 = vpop.f32.mrb[0].mxu0
      %v704 = vadd.f32 %v648, %v703
      %v705 = vpop.f32.mrb[0].mxu0
      %v706 = vpop.f32.mrb[0].mxu0
      %v707 = vadd.f32 %v648, %v706
      %v708 = vpop.f32.mrb[0].mxu0
      %709 = vdwg.mxu0
      %v710 = vxor.u32 %v696, 2147483648
      %v711 = vxor.u32 %v699, 2147483648
      %v712 = vxor.u32 %v704, 2147483648
      %v713 = vxor.u32 %v707, 2147483648
      %v714 = vmul.f32 %v710, 1.442695
      %v715 = vpow.pop %v714
      %v716 = vmul.f32 %v711, 1.442695
      %v717 = vpow.pop %v716
      %v718 = vmul.f32 %v712, 1.442695
      %v719 = vpow.pop %v718
      %v720 = vmul.f32 %v713, 1.442695
      %v721 = vpow.pop %v720
      %v722 = vadd.f32 %v715, 1.0
      %v723 = vadd.f32 %v717, 1.0
      %v724 = vadd.f32 %v719, 1.0
      %v725 = vadd.f32 %v721, 1.0
      %v726 = vrcp.pop %v722
      %v727 = vmul.f32 1.0, %v726
      %v728 = vrcp.pop %v723
      %v729 = vmul.f32 1.0, %v728
      %v730 = vrcp.pop %v724
      %v731 = vmul.f32 1.0, %v730
      %v732 = vrcp.pop %v725
      %v733 = vmul.f32 1.0, %v732
      %v734 = vpack.c.bf16 %v729, %v727
      %v735 = vpack.c.bf16 %v733, %v731
      %v738 = vunpack.c.l.b16 %v734
      %v739 = vunpack.c.h.b16 %v734
      %v740 = vunpack.c.l.b16 %v735
      %v741 = vunpack.c.h.b16 %v735
      %v742 = vpack.c.b16 %v738, %v738
      %v743 = vpack.c.b16 %v739, %v739
      %v744 = vpack.c.b16 %v740, %v740
      %v745 = vpack.c.b16 %v741, %v741
      %vm750 = vcmask 519168
      %751 = vst.msk [vmem:[%s369] sm:$0xf] %vm750, %v742
      %752 = vst.msk [vmem:[%s369 + $0x4] sm:$0xf] %vm750, %v743
      %753 = vst.msk [vmem:[%s369 + $0x8] sm:$0xf] %vm750, %v744
      %754 = vst.msk [vmem:[%s369 + $0xc] sm:$0xf] %vm750, %v745
      %755 = vst.msk [vmem:[%s375] sm:$0xff] %vm575, %v562
      %756 = vst.msk [vmem:[%s375 + $0x8] sm:$0xff] %vm575, %v563
      %757 = vst.msk [vmem:[%s375 + $0x10] sm:$0xff] %vm575, %v564
      %758 = vst.msk [vmem:[%s375 + $0x18] sm:$0xff] %vm575, %v565
      %s759 = smul.u32 4, %s22
      %p760 = scmp.lt.s32.totalorder %s759, 31
      %s761 = scalar_select %p760, %s759, 31
      %s762 = smul.addr %s761, 4
      %s763 = scalar_lea.vmem %s9, %s762
      %s764 = smul.u32 4, %s22
      %p765 = scmp.lt.s32.totalorder %s764, 31
      %s766 = scalar_select %p765, %s764, 31
      %s767 = smul.addr %s766, 8
      %s768 = scalar_lea.vmem %s10, %s767
      // Predicated region
      $region57: #{tpu_custom_call.1} parent=55 // pred_check
        %p769 = pneg %p234
      $region58: #{tpu_custom_call.1} parent=55 // pred_check_branch
        %771 = sbr.rel (%p769) target = $region60
      $region59: #{tpu_custom_call.1} parent=55 // pred_region
        %s772 = smul.u32 4, %s22
      $region60: #{tpu_custom_call.1} parent=55 // pred_fallthru
        _
      // Predicated region
      $region61: #{tpu_custom_call.1} parent=55 // pred_check
        %p773 = pneg %p260
      $region62: #{tpu_custom_call.1} parent=55 // pred_check_branch
        %775 = sbr.rel (%p773) target = $region64
      $region63: #{tpu_custom_call.1} parent=55 // pred_region
        %s776 = smul.u32 4, %s22
      $region64: #{tpu_custom_call.1} parent=55 // pred_fallthru
        _
    $region56: #{tpu_custom_call.1} parent=5 // pred_fallthru
      _
    %p777 = scmp.le.s32.totalorder 2, %s17
    // Predicated region
    $region65: #{tpu_custom_call.1} parent=5 // pred_check
      %p778 = pneg %p777
    $region66: #{tpu_custom_call.1} parent=5 // pred_check_branch
      %780 = sbr.rel (%p778) target = $region68
    $region67: #{tpu_custom_call.1} parent=5 // pred_region
      %s781 = ssub.s32 %s17, 2
      // Predicated region
      $region69: #{tpu_custom_call.1} parent=67 // pred_check
        %p782 = pneg %p240
      $region70: #{tpu_custom_call.1} parent=67 // pred_check_branch
        %784 = sbr.rel (%p782) target = $region72
      $region71: #{tpu_custom_call.1} parent=67 // pred_region
        %s785 = smul.u32 4, %s23
        %p786 = scmp.lt.s32.totalorder %s785, 31
        %s787 = scalar_select %p786, %s785, 31
        %s788 = smul.addr %s787, 4
        %s789 = scalar_lea.vmem %s9, %s788
      $region72: #{tpu_custom_call.1} parent=67 // pred_fallthru
        _
      // Predicated region
      $region73: #{tpu_custom_call.1} parent=67 // pred_check
        %p790 = pneg %p266
      $region74: #{tpu_custom_call.1} parent=67 // pred_check_branch
        %792 = sbr.rel (%p790) target = $region76
      $region75: #{tpu_custom_call.1} parent=67 // pred_region
        %s793 = smul.u32 4, %s23
        %p794 = scmp.lt.s32.totalorder %s793, 31
        %s795 = scalar_select %p794, %s793, 31
        %s796 = smul.addr %s795, 8
        %s797 = scalar_lea.vmem %s10, %s796
      $region76: #{tpu_custom_call.1} parent=67 // pred_fallthru
        _
    $region68: #{tpu_custom_call.1} parent=5 // pred_fallthru
      _
  $region6: #{tpu_custom_call.1} parent=0 // loop_footer
    %s21 = sadd.s32 1, %s17
  $region7: #{tpu_custom_call.1} parent=0 // loop_footer_branch
    %16 = sbr.rel target = $region3
  $region8: #{tpu_custom_call.1} parent=0 // loop_exit
    _

</llo_original>
